<compile_context>
chip_gen: v6e
topology: v6e:2x2x1
jax: 0.10.0
libtpu: 0.0.40
codegen_flags: <defaults>
</compile_context>

<pallas_src>
import functools
import math

import jax
import jax.numpy as jnp
from jax import lax
from jax.experimental import pallas as pl
from jax.experimental.pallas import tpu as pltpu

LN_EPS = 1e-5       # nn.LayerNorm default eps (== self.eps)
CLAMP_EPS = 1e-8    # _norm_no_nan clamp
_MAX_FOLD_WIDTH = 1024   # cap on folded lane width (bounds one-hot matrix size)


def _round_up(x, m):
    return (x + m - 1) // m * m


def _cdiv(a, b):
    return (a + b - 1) // b


def _fold(width):
    """Smallest g with (g * width) % 128 == 0, i.e. a lane-dense folded row."""
    g = 128 // math.gcd(width, 128)
    return g if g * width <= _MAX_FOLD_WIDTH else 1


def _sublane(dtype):
    """Rows per sublane tile: 8 for f32, 16 for bf16, 32 for int8/fp8."""
    return max(8, 32 // jnp.dtype(dtype).itemsize)


def _pick_tile_n(n_pad, row_bytes, t_gran):
    """Row tile (original rows): largest double-buffered in+out slab under a
    conservative VMEM I/O budget, multiple of t_gran, >=2 (preferably even)
    grid steps so both v7x TensorCores get work."""
    budget = 8 * 1024 * 1024            # I/O only; f32 temporaries ride under the 32MiB cap
    per_row = 2 * 2 * row_bytes         # (in + out) x double-buffer
    cap = max(t_gran, (2048 // t_gran) * t_gran)   # 512-2048 rows ~ HBM roofline
    t = max(t_gran, min(cap, ((budget // per_row) // t_gran) * t_gran))
    if t >= n_pad:
        if n_pad >= 2 * t_gran:         # split so the parallel grid axis has >=2 steps
            t = _round_up(_cdiv(n_pad, 2), t_gran)
        else:
            return n_pad                # single block == full extent (always legal)
    steps = _cdiv(n_pad, t)
    if steps in (3, 5, 7):              # prefer an even step count for v7x megacore
        t2 = _round_up(_cdiv(n_pad, steps + 1), t_gran)
        if t2 >= t_gran and _cdiv(n_pad, t2) % 2 == 0:
            t = t2
    return t


def _split_dot(x, m):
    """x @ m with a 0/1 one-hot matrix.  The data operand is split into a bf16 'hi'
    part plus f32 residual so the contraction keeps ~f32 accuracy no matter how the
    MXU decomposes f32 operands (both matmuls are tiny and ride on the idle MXU)."""
    x_hi = x.astype(jnp.bfloat16).astype(jnp.float32)
    x_lo = x - x_hi
    return (jnp.dot(x_hi, m, preferred_element_type=jnp.float32)
            + jnp.dot(x_lo, m, preferred_element_type=jnp.float32))


def _gvp_layernorm_kernel(feats_ref, vec_ref, w_ref, b_ref,
                          sf_ref, bf_ref, sc_ref, mc_ref, bv_ref,
                          nf_ref, nv_ref, *, inv_h, inv_v):
    # ---- scalar features: LayerNorm over each H-wide segment of the folded row ----
    x = feats_ref[...].astype(jnp.float32)              # (rf, g_f*H)
    sf = sf_ref[...]                                     # (g_f*H, Sf)  lane -> segment
    bf = bf_ref[...]                                     # (Sf, g_f*H)  segment -> lane
    mean = _split_dot(x, sf) * inv_h                     # per-segment mean
    xc = x - _split_dot(mean, bf)
    var = _split_dot(xc * xc, sf) * inv_h                # biased variance (torch)
    inv_std = _split_dot(lax.rsqrt(var + LN_EPS), bf)
    nf_ref[...] = (xc * inv_std * w_ref[...] + b_ref[...]).astype(nf_ref.dtype)

    # ---- vector features: non-trainable norm, per-channel clamp BEFORE the mean ----
    v = vec_ref[...].astype(jnp.float32)                 # (rv, g_v*V*D)
    sq = v * v
    chan = _split_dot(sq, sc_ref[...])                   # (rv, Cp) per-channel sum(sq)
    chan = jnp.maximum(chan, CLAMP_EPS)                  # clamp per channel
    vn = _split_dot(chan, mc_ref[...]) * inv_v           # (rv, Rp) mean over V channels
    inv_n = 1.0 / (jnp.sqrt(vn + LN_EPS) + LN_EPS)       # exact divide (no approx recip)
    nv_ref[...] = (v * _split_dot(inv_n, bv_ref[...])).astype(nv_ref.dtype)


def _onehot(ids, num, dtype=jnp.float32):
    """(len(ids), num) one-hot; entries with ids == -1 give all-zero rows."""
    return (ids[:, None] == jnp.arange(num)[None, :]).astype(dtype)


@functools.partial(jax.jit, static_argnames=("tile_n",))
def gvp_layernorm(feats, vectors, weight, bias, *, tile_n=None):
    """Pallas-TPU forward of GVPLayerNorm.  feats: (N, H); vectors: (N, V, 3)."""
    N, H = feats.shape
    Nv, V, D = vectors.shape
    assert Nv == N and weight.shape == (H,) and bias.shape == (H,)
    VD = V * D
    f_dtype, v_dtype = feats.dtype, vectors.dtype

    # ---- lane folding: g consecutive rows -> one lane-dense row (free reshape) ----
    g_f = _fold(H)
    g_v = _fold(VD)
    G = g_f * g_v // math.gcd(g_f, g_v)        # fold granularity in original rows
    Wf, Wv = g_f * H, g_v * VD
    Sf = _round_up(g_f, 8)                     # pad tiny matmul dims up to 8
    Cp = _round_up(g_v * V, 8)
    Rp = _round_up(g_v, 8)

    sub = max(_sublane(f_dtype), _sublane(v_dtype))
    t_gran = sub * G                           # row-tile granularity (sublane packed)

    # Pad N only to the small fold granularity (never to tile_n); also keep folded
    # row counts >= one sublane tile so in-kernel matmuls never see M < 8.
    n_pad = _round_up(max(N, sub * max(g_f, g_v)), G)

    vec2 = vectors.reshape(N, VD)
    if n_pad != N:
        # Zero rows are LayerNorm / vector-norm safe; they are sliced off below.
        feats = jnp.pad(feats, ((0, n_pad - N), (0, 0)))
        vec2 = jnp.pad(vec2, ((0, n_pad - N), (0, 0)))
    feats_f = feats.reshape(n_pad // g_f, Wf)  # free: row-major contiguous
    vec_f = vec2.reshape(n_pad // g_v, Wv)

    # ---- resident constants: tiled affine params + one-hot segment/channel maps ----
    f32 = jnp.float32
    w_fold = jnp.tile(weight.astype(f32), g_f).reshape(1, Wf)
    b_fold = jnp.tile(bias.astype(f32), g_f).reshape(1, Wf)
    seg_f = jnp.arange(Wf) // H                               # lane -> LN segment
    sf = _onehot(seg_f, Sf)                                   # (Wf, Sf)
    bf = sf.T                                                 # (Sf, Wf)
    lane_v = jnp.arange(Wv)
    row_v = lane_v // VD                                      # lane -> row within fold
    chan_id = row_v * V + (lane_v % VD) // D                  # lane -> vector channel
    sc = _onehot(chan_id, Cp)                                 # (Wv, Cp)
    mc = _onehot(jnp.where(jnp.arange(Cp) < g_v * V,
                           jnp.arange(Cp) // V, -1), Rp)      # (Cp, Rp)
    bv = _onehot(row_v, Rp).T                                 # (Rp, Wv)

    row_bytes = (H * jnp.dtype(f_dtype).itemsize
                 + VD * jnp.dtype(v_dtype).itemsize)
    if tile_n is None:
        tile_n = _pick_tile_n(n_pad, row_bytes, t_gran)
    else:
        tile_n = min(n_pad, _round_up(tile_n, t_gran))
    if tile_n >= n_pad:
        tile_n = n_pad
    grid = (_cdiv(n_pad, tile_n),)

    kernel = functools.partial(_gvp_layernorm_kernel, inv_h=1.0 / H, inv_v=1.0 / V)

    def const_spec(shape):
        return pl.BlockSpec(shape, lambda i: (0, 0))          # resident constants

    nf_f, nv_f = pl.pallas_call(
        kernel,
        out_shape=(
            jax.ShapeDtypeStruct((n_pad // g_f, Wf), f_dtype),
            jax.ShapeDtypeStruct((n_pad // g_v, Wv), v_dtype),
        ),
        grid_spec=pltpu.PrefetchScalarGridSpec(
            num_scalar_prefetch=0,
            grid=grid,
            in_specs=[
                pl.BlockSpec((tile_n // g_f, Wf), lambda i: (i, 0)),
                pl.BlockSpec((tile_n // g_v, Wv), lambda i: (i, 0)),
                const_spec((1, Wf)),          # weight (tiled per segment)
                const_spec((1, Wf)),          # bias
                const_spec((Wf, Sf)),         # lane -> LN segment (one-hot)
                const_spec((Sf, Wf)),         # segment -> lane broadcast
                const_spec((Wv, Cp)),         # lane -> vector channel (one-hot)
                const_spec((Cp, Rp)),         # channel -> row (one-hot)
                const_spec((Rp, Wv)),         # row -> lane broadcast
            ],
            out_specs=[
                pl.BlockSpec((tile_n // g_f, Wf), lambda i: (i, 0)),
                pl.BlockSpec((tile_n // g_v, Wv), lambda i: (i, 0)),
            ],
        ),
        compiler_params=pltpu.CompilerParams(
            dimension_semantics=("parallel",),
            vmem_limit_bytes=32 * 1024 * 1024),
    )(feats_f, vec_f, w_fold, b_fold, sf, bf, sc, mc, bv)

    nf = nf_f.reshape(n_pad, H)
    nv = nv_f.reshape(n_pad, VD)
    if n_pad != N:
        nf = nf[:N]
        nv = nv[:N]
    return nf, nv.reshape(N, V, D)


def _reference(feats, vectors, weight, bias):
    x = feats.astype(jnp.float32)
    mean = jnp.mean(x, axis=-1, keepdims=True)
    var = jnp.mean((x - mean) ** 2, axis=-1, keepdims=True)
    nf = (x - mean) / jnp.sqrt(var + LN_EPS) * weight + bias
    v = vectors.astype(jnp.float32)
    vn = jnp.maximum(jnp.sum(v * v, axis=-1, keepdims=True), CLAMP_EPS)
    vn = jnp.sqrt(jnp.mean(vn, axis=-2, keepdims=True) + LN_EPS) + LN_EPS
    return nf, v / vn


if __name__ == "__main__":
    key = jax.random.PRNGKey(0)
    kf, kv, kw, kb = jax.random.split(key, 4)

    H, V, D = 32, 4, 3                       # feats_h_size, vector channels, xyz
    weight = 1.0 + 0.1 * jax.random.normal(kw, (H,), dtype=jnp.float32)
    bias = 0.05 * jax.random.normal(kb, (H,), dtype=jnp.float32)

    ok = True
    # 16: tiny; 19: ragged (exercises fold-granularity padding);
    # 600: multi-step parallel grid with a partial last block on both folded slabs.
    for N in (16, 19, 600):
        feats = jax.random.normal(jax.random.fold_in(kf, N), (N, H), dtype=jnp.float32)
        vectors = jax.random.normal(jax.random.fold_in(kv, N), (N, V, D),
                                    dtype=jnp.float32)

        nf, nv = gvp_layernorm(feats, vectors, weight, bias)
        jax.block_until_ready((nf, nv))

        nf_ref, nv_ref = _reference(feats, vectors, weight, bias)
        ok &= bool(jnp.allclose(nf, nf_ref, atol=2e-5, rtol=2e-5))
        ok &= bool(jnp.allclose(nv, nv_ref, atol=2e-5, rtol=2e-5))

    assert ok
    print("KERNEL_OK")
</pallas_src>

<mosaic_0001>
module attributes {stable_mosaic.version = 11 : i64} {
  func.func @_gvp_layernorm_kernel(%arg0: i32, %arg1: memref<64x128xf32, #tpu.memory_space<vmem>>, %arg2: memref<8x384xf32, #tpu.memory_space<vmem>>, %arg3: memref<1x128xf32, #tpu.memory_space<vmem>>, %arg4: memref<1x128xf32, #tpu.memory_space<vmem>>, %arg5: memref<128x8xf32, #tpu.memory_space<vmem>>, %arg6: memref<8x128xf32, #tpu.memory_space<vmem>>, %arg7: memref<384x128xf32, #tpu.memory_space<vmem>>, %arg8: memref<128x32xf32, #tpu.memory_space<vmem>>, %arg9: memref<32x384xf32, #tpu.memory_space<vmem>>, %arg10: memref<64x128xf32, #tpu.memory_space<vmem>>, %arg11: memref<8x384xf32, #tpu.memory_space<vmem>>) attributes {dimension_semantics = [#tpu.dimension_semantics<parallel>], iteration_bounds = array<i64: 1>, scalar_prefetch = 0 : i64, scratch_operands = 0 : i64, tpu.core_type = #tpu.core_type<tc>, window_params = [{transform_indices = @transform_0, window_bounds = array<i64: 64, 128>}, {transform_indices = @transform_1, window_bounds = array<i64: 8, 384>}, {pipeline_mode = #tpu.pipeline_mode<synchronous>, transform_indices = @transform_2, window_bounds = array<i64: 1, 128>}, {pipeline_mode = #tpu.pipeline_mode<synchronous>, transform_indices = @transform_3, window_bounds = array<i64: 1, 128>}, {pipeline_mode = #tpu.pipeline_mode<synchronous>, transform_indices = @transform_4, window_bounds = array<i64: 128, 8>}, {pipeline_mode = #tpu.pipeline_mode<synchronous>, transform_indices = @transform_5, window_bounds = array<i64: 8, 128>}, {pipeline_mode = #tpu.pipeline_mode<synchronous>, transform_indices = @transform_6, window_bounds = array<i64: 384, 128>}, {pipeline_mode = #tpu.pipeline_mode<synchronous>, transform_indices = @transform_7, window_bounds = array<i64: 128, 32>}, {pipeline_mode = #tpu.pipeline_mode<synchronous>, transform_indices = @transform_8, window_bounds = array<i64: 32, 384>}, {transform_indices = @transform_9, window_bounds = array<i64: 64, 128>}, {transform_indices = @transform_10, window_bounds = array<i64: 8, 384>}]} {
    %c0 = arith.constant 0 : index
    %c0_0 = arith.constant 0 : index
    %0 = vector.load %arg1[%c0, %c0_0] : memref<64x128xf32, #tpu.memory_space<vmem>>, vector<64x128xf32>
    %c0_1 = arith.constant 0 : index
    %c0_2 = arith.constant 0 : index
    %1 = vector.load %arg5[%c0_1, %c0_2] : memref<128x8xf32, #tpu.memory_space<vmem>>, vector<128x8xf32>
    %c0_3 = arith.constant 0 : index
    %c0_4 = arith.constant 0 : index
    %2 = vector.load %arg6[%c0_3, %c0_4] : memref<8x128xf32, #tpu.memory_space<vmem>>, vector<8x128xf32>
    %3 = arith.truncf %0 : vector<64x128xf32> to vector<64x128xbf16>
    %4 = arith.extf %3 : vector<64x128xbf16> to vector<64x128xf32>
    %5 = arith.subf %0, %4 : vector<64x128xf32>
    %cst = arith.constant dense<0.000000e+00> : vector<64x8xf32>
    %6 = tpu.matmul %4, %1, %cst {dimension_numbers = #tpu.dot_dimension_numbers<[1], [0], [0], [1], [0, 0, 1, 1], [], []>} : vector<64x128xf32>, vector<128x8xf32>, vector<64x8xf32> -> vector<64x8xf32>
    %cst_5 = arith.constant dense<0.000000e+00> : vector<64x8xf32>
    %7 = tpu.matmul %5, %1, %cst_5 {dimension_numbers = #tpu.dot_dimension_numbers<[1], [0], [0], [1], [0, 0, 1, 1], [], []>} : vector<64x128xf32>, vector<128x8xf32>, vector<64x8xf32> -> vector<64x8xf32>
    %8 = arith.addf %6, %7 : vector<64x8xf32>
    %cst_6 = arith.constant 3.125000e-02 : f32
    %9 = vector.broadcast %cst_6 : f32 to vector<64x8xf32>
    %10 = arith.mulf %8, %9 : vector<64x8xf32>
    %11 = arith.truncf %10 : vector<64x8xf32> to vector<64x8xbf16>
    %12 = arith.extf %11 : vector<64x8xbf16> to vector<64x8xf32>
    %13 = arith.subf %10, %12 : vector<64x8xf32>
    %cst_7 = arith.constant dense<0.000000e+00> : vector<64x128xf32>
    %14 = tpu.matmul %12, %2, %cst_7 {dimension_numbers = #tpu.dot_dimension_numbers<[1], [0], [0], [1], [0, 0, 1, 1], [], []>} : vector<64x8xf32>, vector<8x128xf32>, vector<64x128xf32> -> vector<64x128xf32>
    %cst_8 = arith.constant dense<0.000000e+00> : vector<64x128xf32>
    %15 = tpu.matmul %13, %2, %cst_8 {dimension_numbers = #tpu.dot_dimension_numbers<[1], [0], [0], [1], [0, 0, 1, 1], [], []>} : vector<64x8xf32>, vector<8x128xf32>, vector<64x128xf32> -> vector<64x128xf32>
    %16 = arith.addf %14, %15 : vector<64x128xf32>
    %17 = arith.subf %0, %16 : vector<64x128xf32>
    %18 = arith.mulf %17, %17 : vector<64x128xf32>
    %19 = arith.truncf %18 : vector<64x128xf32> to vector<64x128xbf16>
    %20 = arith.extf %19 : vector<64x128xbf16> to vector<64x128xf32>
    %21 = arith.subf %18, %20 : vector<64x128xf32>
    %cst_9 = arith.constant dense<0.000000e+00> : vector<64x8xf32>
    %22 = tpu.matmul %20, %1, %cst_9 {dimension_numbers = #tpu.dot_dimension_numbers<[1], [0], [0], [1], [0, 0, 1, 1], [], []>} : vector<64x128xf32>, vector<128x8xf32>, vector<64x8xf32> -> vector<64x8xf32>
    %cst_10 = arith.constant dense<0.000000e+00> : vector<64x8xf32>
    %23 = tpu.matmul %21, %1, %cst_10 {dimension_numbers = #tpu.dot_dimension_numbers<[1], [0], [0], [1], [0, 0, 1, 1], [], []>} : vector<64x128xf32>, vector<128x8xf32>, vector<64x8xf32> -> vector<64x8xf32>
    %24 = arith.addf %22, %23 : vector<64x8xf32>
    %cst_11 = arith.constant 3.125000e-02 : f32
    %25 = vector.broadcast %cst_11 : f32 to vector<64x8xf32>
    %26 = arith.mulf %24, %25 : vector<64x8xf32>
    %cst_12 = arith.constant 9.99999974E-6 : f32
    %27 = vector.broadcast %cst_12 : f32 to vector<64x8xf32>
    %28 = arith.addf %26, %27 : vector<64x8xf32>
    %29 = math.rsqrt %28 : vector<64x8xf32>
    %30 = arith.truncf %29 : vector<64x8xf32> to vector<64x8xbf16>
    %31 = arith.extf %30 : vector<64x8xbf16> to vector<64x8xf32>
    %32 = arith.subf %29, %31 : vector<64x8xf32>
    %cst_13 = arith.constant dense<0.000000e+00> : vector<64x128xf32>
    %33 = tpu.matmul %31, %2, %cst_13 {dimension_numbers = #tpu.dot_dimension_numbers<[1], [0], [0], [1], [0, 0, 1, 1], [], []>} : vector<64x8xf32>, vector<8x128xf32>, vector<64x128xf32> -> vector<64x128xf32>
    %cst_14 = arith.constant dense<0.000000e+00> : vector<64x128xf32>
    %34 = tpu.matmul %32, %2, %cst_14 {dimension_numbers = #tpu.dot_dimension_numbers<[1], [0], [0], [1], [0, 0, 1, 1], [], []>} : vector<64x8xf32>, vector<8x128xf32>, vector<64x128xf32> -> vector<64x128xf32>
    %35 = arith.addf %33, %34 : vector<64x128xf32>
    %36 = arith.mulf %17, %35 : vector<64x128xf32>
    %c0_15 = arith.constant 0 : index
    %c0_16 = arith.constant 0 : index
    %37 = vector.load %arg3[%c0_15, %c0_16] : memref<1x128xf32, #tpu.memory_space<vmem>>, vector<1x128xf32>
    %38 = vector.broadcast %37 : vector<1x128xf32> to vector<64x128xf32>
    %39 = arith.mulf %36, %38 : vector<64x128xf32>
    %c0_17 = arith.constant 0 : index
    %c0_18 = arith.constant 0 : index
    %40 = vector.load %arg4[%c0_17, %c0_18] : memref<1x128xf32, #tpu.memory_space<vmem>>, vector<1x128xf32>
    %41 = vector.broadcast %40 : vector<1x128xf32> to vector<64x128xf32>
    %42 = arith.addf %39, %41 : vector<64x128xf32>
    %c0_19 = arith.constant 0 : index
    %c0_20 = arith.constant 0 : index
    %43 = vector.load %arg10[%c0_19, %c0_20] : memref<64x128xf32, #tpu.memory_space<vmem>>, vector<64x128xf32>
    tpu.vector_store %arg10[%c0_19, %c0_20], %42 {strides = array<i32>} : memref<64x128xf32, #tpu.memory_space<vmem>>, vector<64x128xf32>,
    %c0_21 = arith.constant 0 : index
    %c0_22 = arith.constant 0 : index
    %44 = vector.load %arg2[%c0_21, %c0_22] : memref<8x384xf32, #tpu.memory_space<vmem>>, vector<8x384xf32>
    %45 = arith.mulf %44, %44 : vector<8x384xf32>
    %c0_23 = arith.constant 0 : index
    %c0_24 = arith.constant 0 : index
    %46 = vector.load %arg7[%c0_23, %c0_24] : memref<384x128xf32, #tpu.memory_space<vmem>>, vector<384x128xf32>
    %47 = arith.truncf %45 : vector<8x384xf32> to vector<8x384xbf16>
    %48 = arith.extf %47 : vector<8x384xbf16> to vector<8x384xf32>
    %49 = arith.subf %45, %48 : vector<8x384xf32>
    %cst_25 = arith.constant dense<0.000000e+00> : vector<8x128xf32>
    %50 = tpu.matmul %48, %46, %cst_25 {dimension_numbers = #tpu.dot_dimension_numbers<[1], [0], [0], [1], [0, 0, 1, 1], [], []>} : vector<8x384xf32>, vector<384x128xf32>, vector<8x128xf32> -> vector<8x128xf32>
    %cst_26 = arith.constant dense<0.000000e+00> : vector<8x128xf32>
    %51 = tpu.matmul %49, %46, %cst_26 {dimension_numbers = #tpu.dot_dimension_numbers<[1], [0], [0], [1], [0, 0, 1, 1], [], []>} : vector<8x384xf32>, vector<384x128xf32>, vector<8x128xf32> -> vector<8x128xf32>
    %52 = arith.addf %50, %51 : vector<8x128xf32>
    %cst_27 = arith.constant 9.99999993E-9 : f32
    %53 = vector.broadcast %cst_27 : f32 to vector<8x128xf32>
    %54 = arith.maximumf %52, %53 : vector<8x128xf32>
    %c0_28 = arith.constant 0 : index
    %c0_29 = arith.constant 0 : index
    %55 = vector.load %arg8[%c0_28, %c0_29] : memref<128x32xf32, #tpu.memory_space<vmem>>, vector<128x32xf32>
    %56 = arith.truncf %54 : vector<8x128xf32> to vector<8x128xbf16>
    %57 = arith.extf %56 : vector<8x128xbf16> to vector<8x128xf32>
    %58 = arith.subf %54, %57 : vector<8x128xf32>
    %cst_30 = arith.constant dense<0.000000e+00> : vector<8x32xf32>
    %59 = tpu.matmul %57, %55, %cst_30 {dimension_numbers = #tpu.dot_dimension_numbers<[1], [0], [0], [1], [0, 0, 1, 1], [], []>} : vector<8x128xf32>, vector<128x32xf32>, vector<8x32xf32> -> vector<8x32xf32>
    %cst_31 = arith.constant dense<0.000000e+00> : vector<8x32xf32>
    %60 = tpu.matmul %58, %55, %cst_31 {dimension_numbers = #tpu.dot_dimension_numbers<[1], [0], [0], [1], [0, 0, 1, 1], [], []>} : vector<8x128xf32>, vector<128x32xf32>, vector<8x32xf32> -> vector<8x32xf32>
    %61 = arith.addf %59, %60 : vector<8x32xf32>
    %cst_32 = arith.constant 2.500000e-01 : f32
    %62 = vector.broadcast %cst_32 : f32 to vector<8x32xf32>
    %63 = arith.mulf %61, %62 : vector<8x32xf32>
    %cst_33 = arith.constant 9.99999974E-6 : f32
    %64 = vector.broadcast %cst_33 : f32 to vector<8x32xf32>
    %65 = arith.addf %63, %64 : vector<8x32xf32>
    %66 = math.sqrt %65 : vector<8x32xf32>
    %cst_34 = arith.constant 9.99999974E-6 : f32
    %67 = vector.broadcast %cst_34 : f32 to vector<8x32xf32>
    %68 = arith.addf %66, %67 : vector<8x32xf32>
    %cst_35 = arith.constant 1.000000e+00 : f32
    %69 = vector.broadcast %cst_35 : f32 to vector<8x32xf32>
    %70 = arith.divf %69, %68 : vector<8x32xf32>
    %c0_36 = arith.constant 0 : index
    %c0_37 = arith.constant 0 : index
    %71 = vector.load %arg9[%c0_36, %c0_37] : memref<32x384xf32, #tpu.memory_space<vmem>>, vector<32x384xf32>
    %72 = arith.truncf %70 : vector<8x32xf32> to vector<8x32xbf16>
    %73 = arith.extf %72 : vector<8x32xbf16> to vector<8x32xf32>
    %74 = arith.subf %70, %73 : vector<8x32xf32>
    %cst_38 = arith.constant dense<0.000000e+00> : vector<8x384xf32>
    %75 = tpu.matmul %73, %71, %cst_38 {dimension_numbers = #tpu.dot_dimension_numbers<[1], [0], [0], [1], [0, 0, 1, 1], [], []>} : vector<8x32xf32>, vector<32x384xf32>, vector<8x384xf32> -> vector<8x384xf32>
    %cst_39 = arith.constant dense<0.000000e+00> : vector<8x384xf32>
    %76 = tpu.matmul %74, %71, %cst_39 {dimension_numbers = #tpu.dot_dimension_numbers<[1], [0], [0], [1], [0, 0, 1, 1], [], []>} : vector<8x32xf32>, vector<32x384xf32>, vector<8x384xf32> -> vector<8x384xf32>
    %77 = arith.addf %75, %76 : vector<8x384xf32>
    %78 = arith.mulf %44, %77 : vector<8x384xf32>
    %c0_40 = arith.constant 0 : index
    %c0_41 = arith.constant 0 : index
    %79 = vector.load %arg11[%c0_40, %c0_41] : memref<8x384xf32, #tpu.memory_space<vmem>>, vector<8x384xf32>
    tpu.vector_store %arg11[%c0_40, %c0_41], %78 {strides = array<i32>} : memref<8x384xf32, #tpu.memory_space<vmem>>, vector<8x384xf32>,
    return
  }
  func.func @transform_0(%arg0: i32) -> (i32, i32) {
    %c0_i32 = arith.constant 0 : i32
    %c0_i32_0 = arith.constant 0 : i32
    return %arg0, %c0_i32 : i32, i32
  }
  func.func @transform_1(%arg0: i32) -> (i32, i32) {
    %c0_i32 = arith.constant 0 : i32
    %c0_i32_0 = arith.constant 0 : i32
    return %arg0, %c0_i32 : i32, i32
  }
  func.func @transform_2(%arg0: i32) -> (i32, i32) {
    %c0_i32 = arith.constant 0 : i32
    %c0_i32_0 = arith.constant 0 : i32
    %c0_i32_1 = arith.constant 0 : i32
    return %c0_i32, %c0_i32_0 : i32, i32
  }
  func.func @transform_3(%arg0: i32) -> (i32, i32) {
    %c0_i32 = arith.constant 0 : i32
    %c0_i32_0 = arith.constant 0 : i32
    %c0_i32_1 = arith.constant 0 : i32
    return %c0_i32, %c0_i32_0 : i32, i32
  }
  func.func @transform_4(%arg0: i32) -> (i32, i32) {
    %c0_i32 = arith.constant 0 : i32
    %c0_i32_0 = arith.constant 0 : i32
    %c0_i32_1 = arith.constant 0 : i32
    return %c0_i32, %c0_i32_0 : i32, i32
  }
  func.func @transform_5(%arg0: i32) -> (i32, i32) {
    %c0_i32 = arith.constant 0 : i32
    %c0_i32_0 = arith.constant 0 : i32
    %c0_i32_1 = arith.constant 0 : i32
    return %c0_i32, %c0_i32_0 : i32, i32
  }
  func.func @transform_6(%arg0: i32) -> (i32, i32) {
    %c0_i32 = arith.constant 0 : i32
    %c0_i32_0 = arith.constant 0 : i32
    %c0_i32_1 = arith.constant 0 : i32
    return %c0_i32, %c0_i32_0 : i32, i32
  }
  func.func @transform_7(%arg0: i32) -> (i32, i32) {
    %c0_i32 = arith.constant 0 : i32
    %c0_i32_0 = arith.constant 0 : i32
    %c0_i32_1 = arith.constant 0 : i32
    return %c0_i32, %c0_i32_0 : i32, i32
  }
  func.func @transform_8(%arg0: i32) -> (i32, i32) {
    %c0_i32 = arith.constant 0 : i32
    %c0_i32_0 = arith.constant 0 : i32
    %c0_i32_1 = arith.constant 0 : i32
    return %c0_i32, %c0_i32_0 : i32, i32
  }
  func.func @transform_9(%arg0: i32) -> (i32, i32) {
    %c0_i32 = arith.constant 0 : i32
    %c0_i32_0 = arith.constant 0 : i32
    return %arg0, %c0_i32 : i32, i32
  }
  func.func @transform_10(%arg0: i32) -> (i32, i32) {
    %c0_i32 = arith.constant 0 : i32
    %c0_i32_0 = arith.constant 0 : i32
    return %arg0, %c0_i32 : i32, i32
  }
}

</mosaic_0001>

<llo_original>
// kernel: tile.13
$region0: #{tile.13}
  #allocation0 [shape = 's32[1]{0}', space=sflag, size = 0x4, scoped, tag = 'scoped memory for tile.13']
  %s0 = inlined_call_operand.vmem [shape: f32[32], index: 0, kind: input, shape index: {}]
  %s1 = inlined_call_operand.vmem [shape: f32[4,32], index: 1, kind: output, shape index: {}]
  // Predicated region
  $region2: #{tile.13} parent=0 // pred_check
    _
  $region3: #{tile.13} parent=0 // pred_check_branch
    %3 = sbr.rel (0) target = $region5
  $region4: #{tile.13} parent=0 // pred_region
    _
  $region5: #{tile.13} parent=0 // pred_fallthru
    _
  %v4 = vld [vmem:[%s0] ss:$0 sm:$0xff]
  %5 = vst [vmem:[%s1] sm:$0xf] %v4

// kernel: tile.14
$region0: #{tile.14}
  %s0 = inlined_call_operand.vmem [shape: f32[4,32], index: 0, kind: input, shape index: {}]
  %s1 = inlined_call_operand.vmem [shape: f32[1,128], index: 1, kind: output, shape index: {}]
  $region1: #{tile.14} parent=0
    #allocation0 [shape = 'u8[4096]{0}', space=vmem, size = 0x1000, scoped, tag = 'scoped mem for output reshape']
    #allocation1 [shape = 'u8[4096]{0}', space=vmem, size = 0x1000, scoped, tag = 'scoped mem for input reshape']
    %s3 = sshll.u32 1, 4
    %s4 = ssub.s32 %s3, 1
    %v5 = vld [vmem:[%s0] sm:%s4]
    %6 = vst [vmem:[#allocation1] sm:%s4] %v5
    %v7 = vld [vmem:[#allocation1] sm:$0x1]
    %vm8 = vcmask 261120
    %9 = vst.msk [vmem:[#allocation0] sm:$0x1] %vm8, %v7
    %s10 = scalar_lea.vmem [#allocation1], 3
    %v11 = vld [vmem:[%s10] sm:$0x1]
    %12 = vrot.lane.b32.xlu0 %v11, 96
    %v13 = vpop.permute.xlu0 %12
    %vm14 = vcmask 1048320
    %15 = vst.msk [vmem:[#allocation0] sm:$0x1] %vm14, %v13
    %s16 = scalar_lea.vmem [#allocation1], 2
    %v17 = vld [vmem:[%s16] sm:$0x1]
    %18 = vrot.lane.b32.xlu0 %v17, 64
    %v19 = vpop.permute.xlu0 %18
    %vm20 = vcmask 785920
    %21 = vst.msk [vmem:[#allocation0] sm:$0x1] %vm20, %v19
    %s22 = scalar_lea.vmem [#allocation1], 1
    %v23 = vld [vmem:[%s22] sm:$0x1]
    %24 = vrot.lane.b32.xlu0 %v23, 32
    %v25 = vpop.permute.xlu0 %24
    %vm26 = vcmask 523520
    %27 = vst.msk [vmem:[#allocation0] sm:$0x1] %vm26, %v25
    %s29 = sshll.u32 1, 1
    %s30 = ssub.s32 %s29, 1
    %v32 = vld [vmem:[#allocation0] sm:%s30]
    %s33 = sshll.u32 1, 1
    %s34 = ssub.s32 %s33, 1
    %35 = vst [vmem:[%s1] sm:%s34] %v32

// kernel: gvp_layernorm.1
$region0: #{gvp_layernorm.1}
  #allocation0 [shape = 'u32[]', space=smem, size = 0x4, offset = 0x4, fixed_abs, tag = 'smem constant byte address 0x4 - core index']
  #allocation1 [shape = 'u32[144,128]{1,0:T(1,128)}', space=vmem, size = 0x12000, scoped, tag = 'internal scratch']
  %s0 = inlined_call_operand.vmem [shape: f32[64,128], index: 0, kind: input, shape index: {}]
  %s1 = inlined_call_operand.vmem [shape: f32[8,384], index: 1, kind: input, shape index: {}]
  %s2 = inlined_call_operand.vmem [shape: f32[1,128], index: 2, kind: input, shape index: {}]
  %s3 = inlined_call_operand.vmem [shape: f32[1,128], index: 3, kind: input, shape index: {}]
  %s4 = inlined_call_operand.vmem [shape: f32[128,8], index: 4, kind: input, shape index: {}]
  %s5 = inlined_call_operand.vmem [shape: f32[8,128], index: 5, kind: input, shape index: {}]
  %s6 = inlined_call_operand.vmem [shape: f32[384,128], index: 6, kind: input, shape index: {}]
  %s7 = inlined_call_operand.vmem [shape: f32[128,32], index: 7, kind: input, shape index: {}]
  %s8 = inlined_call_operand.vmem [shape: f32[32,384], index: 8, kind: input, shape index: {}]
  %s9 = inlined_call_operand.vmem [shape: f32[64,128], index: 9, kind: output, shape index: {0}]
  %s10 = inlined_call_operand.vmem [shape: f32[8,384], index: 10, kind: output, shape index: {1}]
  %11 = xla_tuple %s9, %s10
  %s12 = sld [smem:[#allocation0]]
  $region54: #{gvp_layernorm.1} parent=0
    _
  %s14 = ssub.s32 1, %s12
  %s15 = scalar_select 0, %s14, %s12
  // Predicated region
  $region2: #{gvp_layernorm.1} parent=0 // pred_check
    _
  $region3: #{gvp_layernorm.1} parent=0 // pred_check_branch
    %17 = sbr.rel (0) target = $region5
  $region4: #{gvp_layernorm.1} parent=0 // pred_region
    _
  $region5: #{gvp_layernorm.1} parent=0 // pred_fallthru
    _
  // Predicated region
  $region6: #{gvp_layernorm.1} parent=0 // pred_check
    _
  $region7: #{gvp_layernorm.1} parent=0 // pred_check_branch
    %19 = sbr.rel (0) target = $region9
  $region8: #{gvp_layernorm.1} parent=0 // pred_region
    _
  $region9: #{gvp_layernorm.1} parent=0 // pred_fallthru
    _
  // Predicated region
  $region10: #{gvp_layernorm.1} parent=0 // pred_check
    _
  $region11: #{gvp_layernorm.1} parent=0 // pred_check_branch
    %21 = sbr.rel (0) target = $region13
  $region12: #{gvp_layernorm.1} parent=0 // pred_region
    _
  $region13: #{gvp_layernorm.1} parent=0 // pred_fallthru
    _
  // Predicated region
  $region14: #{gvp_layernorm.1} parent=0 // pred_check
    _
  $region15: #{gvp_layernorm.1} parent=0 // pred_check_branch
    %23 = sbr.rel (0) target = $region17
  $region16: #{gvp_layernorm.1} parent=0 // pred_region
    _
  $region17: #{gvp_layernorm.1} parent=0 // pred_fallthru
    _
  // Predicated region
  $region18: #{gvp_layernorm.1} parent=0 // pred_check
    _
  $region19: #{gvp_layernorm.1} parent=0 // pred_check_branch
    %25 = sbr.rel (0) target = $region21
  $region20: #{gvp_layernorm.1} parent=0 // pred_region
    _
  $region21: #{gvp_layernorm.1} parent=0 // pred_fallthru
    _
  // Predicated region
  $region22: #{gvp_layernorm.1} parent=0 // pred_check
    _
  $region23: #{gvp_layernorm.1} parent=0 // pred_check_branch
    %27 = sbr.rel (0) target = $region25
  $region24: #{gvp_layernorm.1} parent=0 // pred_region
    _
  $region25: #{gvp_layernorm.1} parent=0 // pred_fallthru
    _
  // Predicated region
  $region26: #{gvp_layernorm.1} parent=0 // pred_check
    _
  $region27: #{gvp_layernorm.1} parent=0 // pred_check_branch
    %29 = sbr.rel (0) target = $region29
  $region28: #{gvp_layernorm.1} parent=0 // pred_region
    _
  $region29: #{gvp_layernorm.1} parent=0 // pred_fallthru
    _
  // Predicated region
  $region30: #{gvp_layernorm.1} parent=0 // pred_check
    _
  $region31: #{gvp_layernorm.1} parent=0 // pred_check_branch
    %31 = sbr.rel (0) target = $region33
  $region32: #{gvp_layernorm.1} parent=0 // pred_region
    _
  $region33: #{gvp_layernorm.1} parent=0 // pred_fallthru
    _
  // Predicated region
  $region34: #{gvp_layernorm.1} parent=0 // pred_check
    _
  $region35: #{gvp_layernorm.1} parent=0 // pred_check_branch
    %33 = sbr.rel (0) target = $region37
  $region36: #{gvp_layernorm.1} parent=0 // pred_region
    _
  $region37: #{gvp_layernorm.1} parent=0 // pred_fallthru
    _
  %v34 = vld [vmem:[%s0] sm:$0xff]
  %v35 = vld [vmem:[%s0 + $0x8] sm:$0xff]
  %v36 = vld [vmem:[%s0 + $0x10] sm:$0xff]
  %v37 = vld [vmem:[%s0 + $0x18] sm:$0xff]
  %v38 = vld [vmem:[%s0 + $0x20] sm:$0xff]
  %v39 = vld [vmem:[%s0 + $0x28] sm:$0xff]
  %v40 = vld [vmem:[%s0 + $0x30] sm:$0xff]
  %v41 = vld [vmem:[%s0 + $0x38] sm:$0xff]
  %v42 = vld [vmem:[%s4] sm:$0xff]
  %v43 = vld [vmem:[%s4 + $0x8] sm:$0xff]
  %v44 = vld [vmem:[%s4 + $0x10] sm:$0xff]
  %v45 = vld [vmem:[%s4 + $0x18] sm:$0xff]
  %v46 = vld [vmem:[%s4 + $0x20] sm:$0xff]
  %v47 = vld [vmem:[%s4 + $0x28] sm:$0xff]
  %v48 = vld [vmem:[%s4 + $0x30] sm:$0xff]
  %v49 = vld [vmem:[%s4 + $0x38] sm:$0xff]
  %v50 = vld [vmem:[%s4 + $0x40] sm:$0xff]
  %v51 = vld [vmem:[%s4 + $0x48] sm:$0xff]
  %v52 = vld [vmem:[%s4 + $0x50] sm:$0xff]
  %v53 = vld [vmem:[%s4 + $0x58] sm:$0xff]
  %v54 = vld [vmem:[%s4 + $0x60] sm:$0xff]
  %v55 = vld [vmem:[%s4 + $0x68] sm:$0xff]
  %v56 = vld [vmem:[%s4 + $0x70] sm:$0xff]
  %v57 = vld [vmem:[%s4 + $0x78] sm:$0xff]
  %v58 = vld [vmem:[%s5] sm:$0xff]
  %v59 = vpack.c.bf16 %v35, %v34
  %v60 = vpack.c.bf16 %v37, %v36
  %v61 = vpack.c.bf16 %v39, %v38
  %v62 = vpack.c.bf16 %v41, %v40
  %v63 = vunpack.c.l.bf16 %v59
  %v64 = vunpack.c.h.bf16 %v59
  %v65 = vunpack.c.l.bf16 %v60
  %v66 = vunpack.c.h.bf16 %v60
  %v67 = vunpack.c.l.bf16 %v61
  %v68 = vunpack.c.h.bf16 %v61
  %v69 = vunpack.c.l.bf16 %v62
  %v70 = vunpack.c.h.bf16 %v62
  %v71 = vsub.f32 %v34, %v63
  %v72 = vsub.f32 %v35, %v64
  %v73 = vsub.f32 %v36, %v65
  %v74 = vsub.f32 %v37, %v66
  %v75 = vsub.f32 %v38, %v67
  %v76 = vsub.f32 %v39, %v68
  %v77 = vsub.f32 %v40, %v69
  %v78 = vsub.f32 %v41, %v70
  %79 = vmatprep.subr.mxu0 0.0
  %80 = vmatpush1.msra.mxu0 %v57
  %81 = vmatprep.subr.mxu0 0.0
  %82 = vmatpush1.msra.mxu0 %v56
  %83 = vmatprep.subr.mxu0 0.0
  %84 = vmatpush1.msra.mxu0 %v55
  %85 = vmatprep.subr.mxu0 0.0
  %86 = vmatpush1.msra.mxu0 %v54
  %87 = vmatprep.subr.mxu0 0.0
  %88 = vmatpush1.msra.mxu0 %v53
  %89 = vmatprep.subr.mxu0 0.0
  %90 = vmatpush1.msra.mxu0 %v52
  %91 = vmatprep.subr.mxu0 0.0
  %92 = vmatpush1.msra.mxu0 %v51
  %93 = vmatprep.subr.mxu0 0.0
  %94 = vmatpush1.msra.mxu0 %v50
  %95 = vmatprep.subr.mxu0 0.0
  %96 = vmatpush1.msra.mxu0 %v49
  %97 = vmatprep.subr.mxu0 0.0
  %98 = vmatpush1.msra.mxu0 %v48
  %99 = vmatprep.subr.mxu0 0.0
  %100 = vmatpush1.msra.mxu0 %v47
  %101 = vmatprep.subr.mxu0 0.0
  %102 = vmatpush1.msra.mxu0 %v46
  %103 = vmatprep.subr.mxu0 0.0
  %104 = vmatpush1.msra.mxu0 %v45
  %105 = vmatprep.subr.mxu0 0.0
  %106 = vmatpush1.msra.mxu0 %v44
  %107 = vmatprep.subr.mxu0 0.0
  %108 = vmatpush1.msra.mxu0 %v43
  %109 = vmatprep.subr.mxu0 0.0
  %110 = vmatpush1.msra.mxu0 %v42
  %111 = vmatprep.subr.mxu0 0.0
  %112 = vmatpush2.msra.mxu0 0.0
  %113 = vmatprep.subr.mxu0 0.0
  %114 = vmatpush2.msra.mxu0 0.0
  %115 = vmatprep.subr.mxu0 0.0
  %116 = vmatpush2.msra.mxu0 0.0
  %117 = vmatprep.subr.mxu0 0.0
  %118 = vmatpush2.msra.mxu0 0.0
  %119 = vmatprep.subr.mxu0 0.0
  %120 = vmatpush2.msra.mxu0 0.0
  %121 = vmatprep.subr.mxu0 0.0
  %122 = vmatpush2.msra.mxu0 0.0
  %123 = vmatprep.subr.mxu0 0.0
  %124 = vmatpush2.msra.mxu0 0.0
  %125 = vmatprep.subr.mxu0 0.0
  %126 = vmatpush2.msra.mxu0 0.0
  %127 = vmatprep.subr.mxu0 0.0
  %128 = vmatpush2.msra.mxu0 0.0
  %129 = vmatprep.subr.mxu0 0.0
  %130 = vmatpush2.msra.mxu0 0.0
  %131 = vmatprep.subr.mxu0 0.0
  %132 = vmatpush2.msra.mxu0 0.0
  %133 = vmatprep.subr.mxu0 0.0
  %134 = vmatpush2.msra.mxu0 0.0
  %135 = vmatprep.subr.mxu0 0.0
  %136 = vmatpush2.msra.mxu0 0.0
  %137 = vmatprep.subr.mxu0 0.0
  %138 = vmatpush2.msra.mxu0 0.0
  %139 = vmatprep.subr.mxu0 0.0
  %140 = vmatpush2.msra.mxu0 0.0
  %141 = vmatprep.subr.mxu0 0.0
  %142 = vmatpush2.msra.mxu0 0.0
  %143 = vmatprep.mubr.f32.mxu0 0.0
  %144 = vmatmul.mubr.f32.gmra.mxu0 %v71
  %v145 = vpop.f32.mrf.mxu0
  %v146 = vadd.f32 0.0, %v145
  %v147 = vpop.f32.mrf.mxu0
  %148 = vmatprep.mubr.f32.mxu0 0.0
  %149 = vmatmul.mubr.f32.gmra.mxu0 %v72
  %v150 = vpop.f32.mrf.mxu0
  %v151 = vadd.f32 0.0, %v150
  %v152 = vpop.f32.mrf.mxu0
  %153 = vmatprep.mubr.f32.mxu0 0.0
  %154 = vmatmul.mubr.f32.gmra.mxu0 %v73
  %v155 = vpop.f32.mrf.mxu0
  %v156 = vadd.f32 0.0, %v155
  %v157 = vpop.f32.mrf.mxu0
  %158 = vmatprep.mubr.f32.mxu0 0.0
  %159 = vmatmul.mubr.f32.gmra.mxu0 %v74
  %v160 = vpop.f32.mrf.mxu0
  %v161 = vadd.f32 0.0, %v160
  %v162 = vpop.f32.mrf.mxu0
  %163 = vmatprep.mubr.f32.mxu0 0.0
  %164 = vmatmul.mubr.f32.gmra.mxu0 %v75
  %v165 = vpop.f32.mrf.mxu0
  %v166 = vadd.f32 0.0, %v165
  %v167 = vpop.f32.mrf.mxu0
  %168 = vmatprep.mubr.f32.mxu0 0.0
  %169 = vmatmul.mubr.f32.gmra.mxu0 %v76
  %v170 = vpop.f32.mrf.mxu0
  %v171 = vadd.f32 0.0, %v170
  %v172 = vpop.f32.mrf.mxu0
  %173 = vmatprep.mubr.f32.mxu0 0.0
  %174 = vmatmul.mubr.f32.gmra.mxu0 %v77
  %v175 = vpop.f32.mrf.mxu0
  %v176 = vadd.f32 0.0, %v175
  %v177 = vpop.f32.mrf.mxu0
  %178 = vmatprep.mubr.f32.mxu0 0.0
  %179 = vmatmul.mubr.f32.gmra.mxu0 %v78
  %v180 = vpop.f32.mrf.mxu0
  %v181 = vadd.f32 0.0, %v180
  %v182 = vpop.f32.mrf.mxu0
  %183 = vdwg.mxu0
  %184 = vmatprep.subr.mxu0 0.0
  %185 = vmatpush1.msra.mxu0 %v57
  %186 = vmatprep.subr.mxu0 0.0
  %187 = vmatpush1.msra.mxu0 %v56
  %188 = vmatprep.subr.mxu0 0.0
  %189 = vmatpush1.msra.mxu0 %v55
  %190 = vmatprep.subr.mxu0 0.0
  %191 = vmatpush1.msra.mxu0 %v54
  %192 = vmatprep.subr.mxu0 0.0
  %193 = vmatpush1.msra.mxu0 %v53
  %194 = vmatprep.subr.mxu0 0.0
  %195 = vmatpush1.msra.mxu0 %v52
  %196 = vmatprep.subr.mxu0 0.0
  %197 = vmatpush1.msra.mxu0 %v51
  %198 = vmatprep.subr.mxu0 0.0
  %199 = vmatpush1.msra.mxu0 %v50
  %200 = vmatprep.subr.mxu0 0.0
  %201 = vmatpush1.msra.mxu0 %v49
  %202 = vmatprep.subr.mxu0 0.0
  %203 = vmatpush1.msra.mxu0 %v48
  %204 = vmatprep.subr.mxu0 0.0
  %205 = vmatpush1.msra.mxu0 %v47
  %206 = vmatprep.subr.mxu0 0.0
  %207 = vmatpush1.msra.mxu0 %v46
  %208 = vmatprep.subr.mxu0 0.0
  %209 = vmatpush1.msra.mxu0 %v45
  %210 = vmatprep.subr.mxu0 0.0
  %211 = vmatpush1.msra.mxu0 %v44
  %212 = vmatprep.subr.mxu0 0.0
  %213 = vmatpush1.msra.mxu0 %v43
  %214 = vmatprep.subr.mxu0 0.0
  %215 = vmatpush1.msra.mxu0 %v42
  %216 = vmatprep.subr.mxu0 0.0
  %217 = vmatpush2.msra.mxu0 0.0
  %218 = vmatprep.subr.mxu0 0.0
  %219 = vmatpush2.msra.mxu0 0.0
  %220 = vmatprep.subr.mxu0 0.0
  %221 = vmatpush2.msra.mxu0 0.0
  %222 = vmatprep.subr.mxu0 0.0
  %223 = vmatpush2.msra.mxu0 0.0
  %224 = vmatprep.subr.mxu0 0.0
  %225 = vmatpush2.msra.mxu0 0.0
  %226 = vmatprep.subr.mxu0 0.0
  %227 = vmatpush2.msra.mxu0 0.0
  %228 = vmatprep.subr.mxu0 0.0
  %229 = vmatpush2.msra.mxu0 0.0
  %230 = vmatprep.subr.mxu0 0.0
  %231 = vmatpush2.msra.mxu0 0.0
  %232 = vmatprep.subr.mxu0 0.0
  %233 = vmatpush2.msra.mxu0 0.0
  %234 = vmatprep.subr.mxu0 0.0
  %235 = vmatpush2.msra.mxu0 0.0
  %236 = vmatprep.subr.mxu0 0.0
  %237 = vmatpush2.msra.mxu0 0.0
  %238 = vmatprep.subr.mxu0 0.0
  %239 = vmatpush2.msra.mxu0 0.0
  %240 = vmatprep.subr.mxu0 0.0
  %241 = vmatpush2.msra.mxu0 0.0
  %242 = vmatprep.subr.mxu0 0.0
  %243 = vmatpush2.msra.mxu0 0.0
  %244 = vmatprep.subr.mxu0 0.0
  %245 = vmatpush2.msra.mxu0 0.0
  %246 = vmatprep.subr.mxu0 0.0
  %247 = vmatpush2.msra.mxu0 0.0
  %248 = vmatprep.mubr.f32.mxu0 0.0
  %249 = vmatmul.mubr.f32.gmra.mxu0 %v63
  %v250 = vpop.f32.mrf.mxu0
  %v251 = vadd.f32 %v146, %v250
  %v252 = vpop.f32.mrf.mxu0
  %253 = vmatprep.mubr.f32.mxu0 0.0
  %254 = vmatmul.mubr.f32.gmra.mxu0 %v64
  %v255 = vpop.f32.mrf.mxu0
  %v256 = vadd.f32 %v151, %v255
  %v257 = vpop.f32.mrf.mxu0
  %258 = vmatprep.mubr.f32.mxu0 0.0
  %259 = vmatmul.mubr.f32.gmra.mxu0 %v65
  %v260 = vpop.f32.mrf.mxu0
  %v261 = vadd.f32 %v156, %v260
  %v262 = vpop.f32.mrf.mxu0
  %263 = vmatprep.mubr.f32.mxu0 0.0
  %264 = vmatmul.mubr.f32.gmra.mxu0 %v66
  %v265 = vpop.f32.mrf.mxu0
  %v266 = vadd.f32 %v161, %v265
  %v267 = vpop.f32.mrf.mxu0
  %268 = vmatprep.mubr.f32.mxu0 0.0
  %269 = vmatmul.mubr.f32.gmra.mxu0 %v67
  %v270 = vpop.f32.mrf.mxu0
  %v271 = vadd.f32 %v166, %v270
  %v272 = vpop.f32.mrf.mxu0
  %273 = vmatprep.mubr.f32.mxu0 0.0
  %274 = vmatmul.mubr.f32.gmra.mxu0 %v68
  %v275 = vpop.f32.mrf.mxu0
  %v276 = vadd.f32 %v171, %v275
  %v277 = vpop.f32.mrf.mxu0
  %278 = vmatprep.mubr.f32.mxu0 0.0
  %279 = vmatmul.mubr.f32.gmra.mxu0 %v69
  %v280 = vpop.f32.mrf.mxu0
  %v281 = vadd.f32 %v176, %v280
  %v282 = vpop.f32.mrf.mxu0
  %283 = vmatprep.mubr.f32.mxu0 0.0
  %284 = vmatmul.mubr.f32.gmra.mxu0 %v70
  %v285 = vpop.f32.mrf.mxu0
  %v286 = vadd.f32 %v181, %v285
  %v287 = vpop.f32.mrf.mxu0
  %288 = vdwg.mxu0
  %v289 = vmul.f32 %v251, 0.03125
  %v290 = vmul.f32 %v256, 0.03125
  %v291 = vmul.f32 %v261, 0.03125
  %v292 = vmul.f32 %v266, 0.03125
  %v293 = vmul.f32 %v271, 0.03125
  %v294 = vmul.f32 %v276, 0.03125
  %v295 = vmul.f32 %v281, 0.03125
  %v296 = vmul.f32 %v286, 0.03125
  %v297 = vpack.c.bf16 %v290, %v289
  %v298 = vpack.c.bf16 %v292, %v291
  %v299 = vpack.c.bf16 %v294, %v293
  %v300 = vpack.c.bf16 %v296, %v295
  %v301 = vunpack.c.l.bf16 %v297
  %v302 = vunpack.c.h.bf16 %v297
  %v303 = vunpack.c.l.bf16 %v298
  %v304 = vunpack.c.h.bf16 %v298
  %v305 = vunpack.c.l.bf16 %v299
  %v306 = vunpack.c.h.bf16 %v299
  %v307 = vunpack.c.l.bf16 %v300
  %v308 = vunpack.c.h.bf16 %v300
  %v309 = vsub.f32 %v289, %v301
  %v310 = vsub.f32 %v290, %v302
  %v311 = vsub.f32 %v291, %v303
  %v312 = vsub.f32 %v292, %v304
  %v313 = vsub.f32 %v293, %v305
  %v314 = vsub.f32 %v294, %v306
  %v315 = vsub.f32 %v295, %v307
  %v316 = vsub.f32 %v296, %v308
  %vm317 = vcmask 64512
  %v319 = vsel %vm317, %v309, 0
  %v322 = vsel %vm317, %v310, 0
  %v325 = vsel %vm317, %v311, 0
  %v328 = vsel %vm317, %v312, 0
  %v331 = vsel %vm317, %v313, 0
  %v334 = vsel %vm317, %v314, 0
  %v337 = vsel %vm317, %v315, 0
  %v340 = vsel %vm317, %v316, 0
  %342 = vmatprep.subr.mxu0 0.0
  %343 = vmatpush1.msra.mxu0 0.0
  %344 = vmatprep.subr.mxu0 0.0
  %345 = vmatpush1.msra.mxu0 0.0
  %346 = vmatprep.subr.mxu0 0.0
  %347 = vmatpush1.msra.mxu0 0.0
  %348 = vmatprep.subr.mxu0 0.0
  %349 = vmatpush1.msra.mxu0 0.0
  %350 = vmatprep.subr.mxu0 0.0
  %351 = vmatpush1.msra.mxu0 0.0
  %352 = vmatprep.subr.mxu0 0.0
  %353 = vmatpush1.msra.mxu0 0.0
  %354 = vmatprep.subr.mxu0 0.0
  %355 = vmatpush1.msra.mxu0 0.0
  %356 = vmatprep.subr.mxu0 0.0
  %357 = vmatpush1.msra.mxu0 0.0
  %358 = vmatprep.subr.mxu0 0.0
  %359 = vmatpush1.msra.mxu0 0.0
  %360 = vmatprep.subr.mxu0 0.0
  %361 = vmatpush1.msra.mxu0 0.0
  %362 = vmatprep.subr.mxu0 0.0
  %363 = vmatpush1.msra.mxu0 0.0
  %364 = vmatprep.subr.mxu0 0.0
  %365 = vmatpush1.msra.mxu0 0.0
  %366 = vmatprep.subr.mxu0 0.0
  %367 = vmatpush1.msra.mxu0 0.0
  %368 = vmatprep.subr.mxu0 0.0
  %369 = vmatpush1.msra.mxu0 0.0
  %370 = vmatprep.subr.mxu0 0.0
  %371 = vmatpush1.msra.mxu0 0.0
  %372 = vmatprep.subr.mxu0 0.0
  %373 = vmatpush1.msra.mxu0 %v58
  %374 = vmatprep.subr.mxu0 0.0
  %375 = vmatpush2.msra.mxu0 0.0
  %376 = vmatprep.subr.mxu0 0.0
  %377 = vmatpush2.msra.mxu0 0.0
  %378 = vmatprep.subr.mxu0 0.0
  %379 = vmatpush2.msra.mxu0 0.0
  %380 = vmatprep.subr.mxu0 0.0
  %381 = vmatpush2.msra.mxu0 0.0
  %382 = vmatprep.subr.mxu0 0.0
  %383 = vmatpush2.msra.mxu0 0.0
  %384 = vmatprep.subr.mxu0 0.0
  %385 = vmatpush2.msra.mxu0 0.0
  %386 = vmatprep.subr.mxu0 0.0
  %387 = vmatpush2.msra.mxu0 0.0
  %388 = vmatprep.subr.mxu0 0.0
  %389 = vmatpush2.msra.mxu0 0.0
  %390 = vmatprep.subr.mxu0 0.0
  %391 = vmatpush2.msra.mxu0 0.0
  %392 = vmatprep.subr.mxu0 0.0
  %393 = vmatpush2.msra.mxu0 0.0
  %394 = vmatprep.subr.mxu0 0.0
  %395 = vmatpush2.msra.mxu0 0.0
  %396 = vmatprep.subr.mxu0 0.0
  %397 = vmatpush2.msra.mxu0 0.0
  %398 = vmatprep.subr.mxu0 0.0
  %399 = vmatpush2.msra.mxu0 0.0
  %400 = vmatprep.subr.mxu0 0.0
  %401 = vmatpush2.msra.mxu0 0.0
  %402 = vmatprep.subr.mxu0 0.0
  %403 = vmatpush2.msra.mxu0 0.0
  %404 = vmatprep.subr.mxu0 0.0
  %405 = vmatpush2.msra.mxu0 0.0
  %406 = vmatprep.mubr.f32.mxu0 0.0
  %407 = vmatmul.mubr.f32.gmra.mxu0 %v319
  %v408 = vpop.f32.mrf.mxu0
  %v409 = vadd.f32 0.0, %v408
  %v410 = vpop.f32.mrf.mxu0
  %411 = vmatprep.mubr.f32.mxu0 0.0
  %412 = vmatmul.mubr.f32.gmra.mxu0 %v322
  %v413 = vpop.f32.mrf.mxu0
  %v414 = vadd.f32 0.0, %v413
  %v415 = vpop.f32.mrf.mxu0
  %416 = vmatprep.mubr.f32.mxu0 0.0
  %417 = vmatmul.mubr.f32.gmra.mxu0 %v325
  %v418 = vpop.f32.mrf.mxu0
  %v419 = vadd.f32 0.0, %v418
  %v420 = vpop.f32.mrf.mxu0
  %421 = vmatprep.mubr.f32.mxu0 0.0
  %422 = vmatmul.mubr.f32.gmra.mxu0 %v328
  %v423 = vpop.f32.mrf.mxu0
  %v424 = vadd.f32 0.0, %v423
  %v425 = vpop.f32.mrf.mxu0
  %426 = vmatprep.mubr.f32.mxu0 0.0
  %427 = vmatmul.mubr.f32.gmra.mxu0 %v331
  %v428 = vpop.f32.mrf.mxu0
  %v429 = vadd.f32 0.0, %v428
  %v430 = vpop.f32.mrf.mxu0
  %431 = vmatprep.mubr.f32.mxu0 0.0
  %432 = vmatmul.mubr.f32.gmra.mxu0 %v334
  %v433 = vpop.f32.mrf.mxu0
  %v434 = vadd.f32 0.0, %v433
  %v435 = vpop.f32.mrf.mxu0
  %436 = vmatprep.mubr.f32.mxu0 0.0
  %437 = vmatmul.mubr.f32.gmra.mxu0 %v337
  %v438 = vpop.f32.mrf.mxu0
  %v439 = vadd.f32 0.0, %v438
  %v440 = vpop.f32.mrf.mxu0
  %441 = vmatprep.mubr.f32.mxu0 0.0
  %442 = vmatmul.mubr.f32.gmra.mxu0 %v340
  %v443 = vpop.f32.mrf.mxu0
  %v444 = vadd.f32 0.0, %v443
  %v445 = vpop.f32.mrf.mxu0
  %446 = vdwg.mxu0
  %v448 = vsel %vm317, %v301, 0
  %v451 = vsel %vm317, %v302, 0
  %v454 = vsel %vm317, %v303, 0
  %v457 = vsel %vm317, %v304, 0
  %v460 = vsel %vm317, %v305, 0
  %v463 = vsel %vm317, %v306, 0
  %v466 = vsel %vm317, %v307, 0
  %v469 = vsel %vm317, %v308, 0
  %471 = vmatprep.subr.mxu0 0.0
  %472 = vmatpush1.msra.mxu0 0.0
  %473 = vmatprep.subr.mxu0 0.0
  %474 = vmatpush1.msra.mxu0 0.0
  %475 = vmatprep.subr.mxu0 0.0
  %476 = vmatpush1.msra.mxu0 0.0
  %477 = vmatprep.subr.mxu0 0.0
  %478 = vmatpush1.msra.mxu0 0.0
  %479 = vmatprep.subr.mxu0 0.0
  %480 = vmatpush1.msra.mxu0 0.0
  %481 = vmatprep.subr.mxu0 0.0
  %482 = vmatpush1.msra.mxu0 0.0
  %483 = vmatprep.subr.mxu0 0.0
  %484 = vmatpush1.msra.mxu0 0.0
  %485 = vmatprep.subr.mxu0 0.0
  %486 = vmatpush1.msra.mxu0 0.0
  %487 = vmatprep.subr.mxu0 0.0
  %488 = vmatpush1.msra.mxu0 0.0
  %489 = vmatprep.subr.mxu0 0.0
  %490 = vmatpush1.msra.mxu0 0.0
  %491 = vmatprep.subr.mxu0 0.0
  %492 = vmatpush1.msra.mxu0 0.0
  %493 = vmatprep.subr.mxu0 0.0
  %494 = vmatpush1.msra.mxu0 0.0
  %495 = vmatprep.subr.mxu0 0.0
  %496 = vmatpush1.msra.mxu0 0.0
  %497 = vmatprep.subr.mxu0 0.0
  %498 = vmatpush1.msra.mxu0 0.0
  %499 = vmatprep.subr.mxu0 0.0
  %500 = vmatpush1.msra.mxu0 0.0
  %501 = vmatprep.subr.mxu0 0.0
  %502 = vmatpush1.msra.mxu0 %v58
  %503 = vmatprep.subr.mxu0 0.0
  %504 = vmatpush2.msra.mxu0 0.0
  %505 = vmatprep.subr.mxu0 0.0
  %506 = vmatpush2.msra.mxu0 0.0
  %507 = vmatprep.subr.mxu0 0.0
  %508 = vmatpush2.msra.mxu0 0.0
  %509 = vmatprep.subr.mxu0 0.0
  %510 = vmatpush2.msra.mxu0 0.0
  %511 = vmatprep.subr.mxu0 0.0
  %512 = vmatpush2.msra.mxu0 0.0
  %513 = vmatprep.subr.mxu0 0.0
  %514 = vmatpush2.msra.mxu0 0.0
  %515 = vmatprep.subr.mxu0 0.0
  %516 = vmatpush2.msra.mxu0 0.0
  %517 = vmatprep.subr.mxu0 0.0
  %518 = vmatpush2.msra.mxu0 0.0
  %519 = vmatprep.subr.mxu0 0.0
  %520 = vmatpush2.msra.mxu0 0.0
  %521 = vmatprep.subr.mxu0 0.0
  %522 = vmatpush2.msra.mxu0 0.0
  %523 = vmatprep.subr.mxu0 0.0
  %524 = vmatpush2.msra.mxu0 0.0
  %525 = vmatprep.subr.mxu0 0.0
  %526 = vmatpush2.msra.mxu0 0.0
  %527 = vmatprep.subr.mxu0 0.0
  %528 = vmatpush2.msra.mxu0 0.0
  %529 = vmatprep.subr.mxu0 0.0
  %530 = vmatpush2.msra.mxu0 0.0
  %531 = vmatprep.subr.mxu0 0.0
  %532 = vmatpush2.msra.mxu0 0.0
  %533 = vmatprep.subr.mxu0 0.0
  %534 = vmatpush2.msra.mxu0 0.0
  %535 = vmatprep.mubr.f32.mxu0 0.0
  %536 = vmatmul.mubr.f32.gmra.mxu0 %v448
  %v537 = vpop.f32.mrf.mxu0
  %v538 = vadd.f32 %v409, %v537
  %v539 = vpop.f32.mrf.mxu0
  %540 = vmatprep.mubr.f32.mxu0 0.0
  %541 = vmatmul.mubr.f32.gmra.mxu0 %v451
  %v542 = vpop.f32.mrf.mxu0
  %v543 = vadd.f32 %v414, %v542
  %v544 = vpop.f32.mrf.mxu0
  %545 = vmatprep.mubr.f32.mxu0 0.0
  %546 = vmatmul.mubr.f32.gmra.mxu0 %v454
  %v547 = vpop.f32.mrf.mxu0
  %v548 = vadd.f32 %v419, %v547
  %v549 = vpop.f32.mrf.mxu0
  %550 = vmatprep.mubr.f32.mxu0 0.0
  %551 = vmatmul.mubr.f32.gmra.mxu0 %v457
  %v552 = vpop.f32.mrf.mxu0
  %v553 = vadd.f32 %v424, %v552
  %v554 = vpop.f32.mrf.mxu0
  %555 = vmatprep.mubr.f32.mxu0 0.0
  %556 = vmatmul.mubr.f32.gmra.mxu0 %v460
  %v557 = vpop.f32.mrf.mxu0
  %v558 = vadd.f32 %v429, %v557
  %v559 = vpop.f32.mrf.mxu0
  %560 = vmatprep.mubr.f32.mxu0 0.0
  %561 = vmatmul.mubr.f32.gmra.mxu0 %v463
  %v562 = vpop.f32.mrf.mxu0
  %v563 = vadd.f32 %v434, %v562
  %v564 = vpop.f32.mrf.mxu0
  %565 = vmatprep.mubr.f32.mxu0 0.0
  %566 = vmatmul.mubr.f32.gmra.mxu0 %v466
  %v567 = vpop.f32.mrf.mxu0
  %v568 = vadd.f32 %v439, %v567
  %v569 = vpop.f32.mrf.mxu0
  %570 = vmatprep.mubr.f32.mxu0 0.0
  %571 = vmatmul.mubr.f32.gmra.mxu0 %v469
  %v572 = vpop.f32.mrf.mxu0
  %v573 = vadd.f32 %v444, %v572
  %v574 = vpop.f32.mrf.mxu0
  %575 = vdwg.mxu0
  %v576 = vsub.f32 %v34, %v538
  %v577 = vsub.f32 %v35, %v543
  %v578 = vsub.f32 %v36, %v548
  %v579 = vsub.f32 %v37, %v553
  %v580 = vsub.f32 %v38, %v558
  %v581 = vsub.f32 %v39, %v563
  %v582 = vsub.f32 %v40, %v568
  %v583 = vsub.f32 %v41, %v573
  %v584 = vmul.f32 %v576, %v576
  %v585 = vmul.f32 %v577, %v577
  %v586 = vmul.f32 %v578, %v578
  %v587 = vmul.f32 %v579, %v579
  %v588 = vmul.f32 %v580, %v580
  %v589 = vmul.f32 %v581, %v581
  %v590 = vmul.f32 %v582, %v582
  %v591 = vmul.f32 %v583, %v583
  %v592 = vpack.c.bf16 %v585, %v584
  %v593 = vpack.c.bf16 %v587, %v586
  %v594 = vpack.c.bf16 %v589, %v588
  %v595 = vpack.c.bf16 %v591, %v590
  %v596 = vunpack.c.l.bf16 %v592
  %v597 = vunpack.c.h.bf16 %v592
  %v598 = vunpack.c.l.bf16 %v593
  %v599 = vunpack.c.h.bf16 %v593
  %v600 = vunpack.c.l.bf16 %v594
  %v601 = vunpack.c.h.bf16 %v594
  %v602 = vunpack.c.l.bf16 %v595
  %v603 = vunpack.c.h.bf16 %v595
  %v604 = vsub.f32 %v584, %v596
  %v605 = vsub.f32 %v585, %v597
  %v606 = vsub.f32 %v586, %v598
  %v607 = vsub.f32 %v587, %v599
  %v608 = vsub.f32 %v588, %v600
  %v609 = vsub.f32 %v589, %v601
  %v610 = vsub.f32 %v590, %v602
  %v611 = vsub.f32 %v591, %v603
  %612 = vmatprep.subr.mxu0 0.0
  %613 = vmatpush1.msra.mxu0 %v57
  %614 = vmatprep.subr.mxu0 0.0
  %615 = vmatpush1.msra.mxu0 %v56
  %616 = vmatprep.subr.mxu0 0.0
  %617 = vmatpush1.msra.mxu0 %v55
  %618 = vmatprep.subr.mxu0 0.0
  %619 = vmatpush1.msra.mxu0 %v54
  %620 = vmatprep.subr.mxu0 0.0
  %621 = vmatpush1.msra.mxu0 %v53
  %622 = vmatprep.subr.mxu0 0.0
  %623 = vmatpush1.msra.mxu0 %v52
  %624 = vmatprep.subr.mxu0 0.0
  %625 = vmatpush1.msra.mxu0 %v51
  %626 = vmatprep.subr.mxu0 0.0
  %627 = vmatpush1.msra.mxu0 %v50
  %628 = vmatprep.subr.mxu0 0.0
  %629 = vmatpush1.msra.mxu0 %v49
  %630 = vmatprep.subr.mxu0 0.0
  %631 = vmatpush1.msra.mxu0 %v48
  %632 = vmatprep.subr.mxu0 0.0
  %633 = vmatpush1.msra.mxu0 %v47
  %634 = vmatprep.subr.mxu0 0.0
  %635 = vmatpush1.msra.mxu0 %v46
  %636 = vmatprep.subr.mxu0 0.0
  %637 = vmatpush1.msra.mxu0 %v45
  %638 = vmatprep.subr.mxu0 0.0
  %639 = vmatpush1.msra.mxu0 %v44
  %640 = vmatprep.subr.mxu0 0.0
  %641 = vmatpush1.msra.mxu0 %v43
  %642 = vmatprep.subr.mxu0 0.0
  %643 = vmatpush1.msra.mxu0 %v42
  %644 = vmatprep.subr.mxu0 0.0
  %645 = vmatpush2.msra.mxu0 0.0
  %646 = vmatprep.subr.mxu0 0.0
  %647 = vmatpush2.msra.mxu0 0.0
  %648 = vmatprep.subr.mxu0 0.0
  %649 = vmatpush2.msra.mxu0 0.0
  %650 = vmatprep.subr.mxu0 0.0
  %651 = vmatpush2.msra.mxu0 0.0
  %652 = vmatprep.subr.mxu0 0.0
  %653 = vmatpush2.msra.mxu0 0.0
  %654 = vmatprep.subr.mxu0 0.0
  %655 = vmatpush2.msra.mxu0 0.0
  %656 = vmatprep.subr.mxu0 0.0
  %657 = vmatpush2.msra.mxu0 0.0
  %658 = vmatprep.subr.mxu0 0.0
  %659 = vmatpush2.msra.mxu0 0.0
  %660 = vmatprep.subr.mxu0 0.0
  %661 = vmatpush2.msra.mxu0 0.0
  %662 = vmatprep.subr.mxu0 0.0
  %663 = vmatpush2.msra.mxu0 0.0
  %664 = vmatprep.subr.mxu0 0.0
  %665 = vmatpush2.msra.mxu0 0.0
  %666 = vmatprep.subr.mxu0 0.0
  %667 = vmatpush2.msra.mxu0 0.0
  %668 = vmatprep.subr.mxu0 0.0
  %669 = vmatpush2.msra.mxu0 0.0
  %670 = vmatprep.subr.mxu0 0.0
  %671 = vmatpush2.msra.mxu0 0.0
  %672 = vmatprep.subr.mxu0 0.0
  %673 = vmatpush2.msra.mxu0 0.0
  %674 = vmatprep.subr.mxu0 0.0
  %675 = vmatpush2.msra.mxu0 0.0
  %676 = vmatprep.mubr.f32.mxu0 0.0
  %677 = vmatmul.mubr.f32.gmra.mxu0 %v604
  %v678 = vpop.f32.mrf.mxu0
  %v679 = vadd.f32 0.0, %v678
  %v680 = vpop.f32.mrf.mxu0
  %681 = vmatprep.mubr.f32.mxu0 0.0
  %682 = vmatmul.mubr.f32.gmra.mxu0 %v605
  %v683 = vpop.f32.mrf.mxu0
  %v684 = vadd.f32 0.0, %v683
  %v685 = vpop.f32.mrf.mxu0
  %686 = vmatprep.mubr.f32.mxu0 0.0
  %687 = vmatmul.mubr.f32.gmra.mxu0 %v606
  %v688 = vpop.f32.mrf.mxu0
  %v689 = vadd.f32 0.0, %v688
  %v690 = vpop.f32.mrf.mxu0
  %691 = vmatprep.mubr.f32.mxu0 0.0
  %692 = vmatmul.mubr.f32.gmra.mxu0 %v607
  %v693 = vpop.f32.mrf.mxu0
  %v694 = vadd.f32 0.0, %v693
  %v695 = vpop.f32.mrf.mxu0
  %696 = vmatprep.mubr.f32.mxu0 0.0
  %697 = vmatmul.mubr.f32.gmra.mxu0 %v608
  %v698 = vpop.f32.mrf.mxu0
  %v699 = vadd.f32 0.0, %v698
  %v700 = vpop.f32.mrf.mxu0
  %701 = vmatprep.mubr.f32.mxu0 0.0
  %702 = vmatmul.mubr.f32.gmra.mxu0 %v609
  %v703 = vpop.f32.mrf.mxu0
  %v704 = vadd.f32 0.0, %v703
  %v705 = vpop.f32.mrf.mxu0
  %706 = vmatprep.mubr.f32.mxu0 0.0
  %707 = vmatmul.mubr.f32.gmra.mxu0 %v610
  %v708 = vpop.f32.mrf.mxu0
  %v709 = vadd.f32 0.0, %v708
  %v710 = vpop.f32.mrf.mxu0
  %711 = vmatprep.mubr.f32.mxu0 0.0
  %712 = vmatmul.mubr.f32.gmra.mxu0 %v611
  %v713 = vpop.f32.mrf.mxu0
  %v714 = vadd.f32 0.0, %v713
  %v715 = vpop.f32.mrf.mxu0
  %716 = vdwg.mxu0
  %717 = vmatprep.subr.mxu0 0.0
  %718 = vmatpush1.msra.mxu0 %v57
  %719 = vmatprep.subr.mxu0 0.0
  %720 = vmatpush1.msra.mxu0 %v56
  %721 = vmatprep.subr.mxu0 0.0
  %722 = vmatpush1.msra.mxu0 %v55
  %723 = vmatprep.subr.mxu0 0.0
  %724 = vmatpush1.msra.mxu0 %v54
  %725 = vmatprep.subr.mxu0 0.0
  %726 = vmatpush1.msra.mxu0 %v53
  %727 = vmatprep.subr.mxu0 0.0
  %728 = vmatpush1.msra.mxu0 %v52
  %729 = vmatprep.subr.mxu0 0.0
  %730 = vmatpush1.msra.mxu0 %v51
  %731 = vmatprep.subr.mxu0 0.0
  %732 = vmatpush1.msra.mxu0 %v50
  %733 = vmatprep.subr.mxu0 0.0
  %734 = vmatpush1.msra.mxu0 %v49
  %735 = vmatprep.subr.mxu0 0.0
  %736 = vmatpush1.msra.mxu0 %v48
  %737 = vmatprep.subr.mxu0 0.0
  %738 = vmatpush1.msra.mxu0 %v47
  %739 = vmatprep.subr.mxu0 0.0
  %740 = vmatpush1.msra.mxu0 %v46
  %741 = vmatprep.subr.mxu0 0.0
  %742 = vmatpush1.msra.mxu0 %v45
  %743 = vmatprep.subr.mxu0 0.0
  %744 = vmatpush1.msra.mxu0 %v44
  %745 = vmatprep.subr.mxu0 0.0
  %746 = vmatpush1.msra.mxu0 %v43
  %747 = vmatprep.subr.mxu0 0.0
  %748 = vmatpush1.msra.mxu0 %v42
  %749 = vmatprep.subr.mxu0 0.0
  %750 = vmatpush2.msra.mxu0 0.0
  %751 = vmatprep.subr.mxu0 0.0
  %752 = vmatpush2.msra.mxu0 0.0
  %753 = vmatprep.subr.mxu0 0.0
  %754 = vmatpush2.msra.mxu0 0.0
  %755 = vmatprep.subr.mxu0 0.0
  %756 = vmatpush2.msra.mxu0 0.0
  %757 = vmatprep.subr.mxu0 0.0
  %758 = vmatpush2.msra.mxu0 0.0
  %759 = vmatprep.subr.mxu0 0.0
  %760 = vmatpush2.msra.mxu0 0.0
  %761 = vmatprep.subr.mxu0 0.0
  %762 = vmatpush2.msra.mxu0 0.0
  %763 = vmatprep.subr.mxu0 0.0
  %764 = vmatpush2.msra.mxu0 0.0
  %765 = vmatprep.subr.mxu0 0.0
  %766 = vmatpush2.msra.mxu0 0.0
  %767 = vmatprep.subr.mxu0 0.0
  %768 = vmatpush2.msra.mxu0 0.0
  %769 = vmatprep.subr.mxu0 0.0
  %770 = vmatpush2.msra.mxu0 0.0
  %771 = vmatprep.subr.mxu0 0.0
  %772 = vmatpush2.msra.mxu0 0.0
  %773 = vmatprep.subr.mxu0 0.0
  %774 = vmatpush2.msra.mxu0 0.0
  %775 = vmatprep.subr.mxu0 0.0
  %776 = vmatpush2.msra.mxu0 0.0
  %777 = vmatprep.subr.mxu0 0.0
  %778 = vmatpush2.msra.mxu0 0.0
  %779 = vmatprep.subr.mxu0 0.0
  %780 = vmatpush2.msra.mxu0 0.0
  %781 = vmatprep.mubr.f32.mxu0 0.0
  %782 = vmatmul.mubr.f32.gmra.mxu0 %v596
  %v783 = vpop.f32.mrf.mxu0
  %v784 = vadd.f32 %v679, %v783
  %v785 = vpop.f32.mrf.mxu0
  %786 = vmatprep.mubr.f32.mxu0 0.0
  %787 = vmatmul.mubr.f32.gmra.mxu0 %v597
  %v788 = vpop.f32.mrf.mxu0
  %v789 = vadd.f32 %v684, %v788
  %v790 = vpop.f32.mrf.mxu0
  %791 = vmatprep.mubr.f32.mxu0 0.0
  %792 = vmatmul.mubr.f32.gmra.mxu0 %v598
  %v793 = vpop.f32.mrf.mxu0
  %v794 = vadd.f32 %v689, %v793
  %v795 = vpop.f32.mrf.mxu0
  %796 = vmatprep.mubr.f32.mxu0 0.0
  %797 = vmatmul.mubr.f32.gmra.mxu0 %v599
  %v798 = vpop.f32.mrf.mxu0
  %v799 = vadd.f32 %v694, %v798
  %v800 = vpop.f32.mrf.mxu0
  %801 = vmatprep.mubr.f32.mxu0 0.0
  %802 = vmatmul.mubr.f32.gmra.mxu0 %v600
  %v803 = vpop.f32.mrf.mxu0
  %v804 = vadd.f32 %v699, %v803
  %v805 = vpop.f32.mrf.mxu0
  %806 = vmatprep.mubr.f32.mxu0 0.0
  %807 = vmatmul.mubr.f32.gmra.mxu0 %v601
  %v808 = vpop.f32.mrf.mxu0
  %v809 = vadd.f32 %v704, %v808
  %v810 = vpop.f32.mrf.mxu0
  %811 = vmatprep.mubr.f32.mxu0 0.0
  %812 = vmatmul.mubr.f32.gmra.mxu0 %v602
  %v813 = vpop.f32.mrf.mxu0
  %v814 = vadd.f32 %v709, %v813
  %v815 = vpop.f32.mrf.mxu0
  %816 = vmatprep.mubr.f32.mxu0 0.0
  %817 = vmatmul.mubr.f32.gmra.mxu0 %v603
  %v818 = vpop.f32.mrf.mxu0
  %v819 = vadd.f32 %v714, %v818
  %v820 = vpop.f32.mrf.mxu0
  %821 = vdwg.mxu0
  %v822 = vmul.f32 %v784, 0.03125
  %v823 = vmul.f32 %v789, 0.03125
  %v824 = vmul.f32 %v794, 0.03125
  %v825 = vmul.f32 %v799, 0.03125
  %v826 = vmul.f32 %v804, 0.03125
  %v827 = vmul.f32 %v809, 0.03125
  %v828 = vmul.f32 %v814, 0.03125
  %v829 = vmul.f32 %v819, 0.03125
  %v830 = vadd.f32 %v822, 1e-05
  %v831 = vadd.f32 %v823, 1e-05
  %v832 = vadd.f32 %v824, 1e-05
  %v833 = vadd.f32 %v825, 1e-05
  %v834 = vadd.f32 %v826, 1e-05
  %v835 = vadd.f32 %v827, 1e-05
  %v836 = vadd.f32 %v828, 1e-05
  %v837 = vadd.f32 %v829, 1e-05
  %v838 = vrsqrt.pop %v830
  %v839 = vrsqrt.pop %v831
  %v840 = vrsqrt.pop %v832
  %v841 = vrsqrt.pop %v833
  %v842 = vrsqrt.pop %v834
  %v843 = vrsqrt.pop %v835
  %v844 = vrsqrt.pop %v836
  %v845 = vrsqrt.pop %v837
  %v846 = vpack.c.bf16 %v839, %v838
  %v847 = vpack.c.bf16 %v841, %v840
  %v848 = vpack.c.bf16 %v843, %v842
  %v849 = vpack.c.bf16 %v845, %v844
  %v850 = vunpack.c.l.bf16 %v846
  %v851 = vunpack.c.h.bf16 %v846
  %v852 = vunpack.c.l.bf16 %v847
  %v853 = vunpack.c.h.bf16 %v847
  %v854 = vunpack.c.l.bf16 %v848
  %v855 = vunpack.c.h.bf16 %v848
  %v856 = vunpack.c.l.bf16 %v849
  %v857 = vunpack.c.h.bf16 %v849
  %v858 = vsub.f32 %v838, %v850
  %v859 = vsub.f32 %v839, %v851
  %v860 = vsub.f32 %v840, %v852
  %v861 = vsub.f32 %v841, %v853
  %v862 = vsub.f32 %v842, %v854
  %v863 = vsub.f32 %v843, %v855
  %v864 = vsub.f32 %v844, %v856
  %v865 = vsub.f32 %v845, %v857
  %v867 = vsel %vm317, %v858, 0
  %v870 = vsel %vm317, %v859, 0
  %v873 = vsel %vm317, %v860, 0
  %v876 = vsel %vm317, %v861, 0
  %v879 = vsel %vm317, %v862, 0
  %v882 = vsel %vm317, %v863, 0
  %v885 = vsel %vm317, %v864, 0
  %v888 = vsel %vm317, %v865, 0
  %890 = vmatprep.subr.mxu0 0.0
  %891 = vmatpush1.msra.mxu0 0.0
  %892 = vmatprep.subr.mxu0 0.0
  %893 = vmatpush1.msra.mxu0 0.0
  %894 = vmatprep.subr.mxu0 0.0
  %895 = vmatpush1.msra.mxu0 0.0
  %896 = vmatprep.subr.mxu0 0.0
  %897 = vmatpush1.msra.mxu0 0.0
  %898 = vmatprep.subr.mxu0 0.0
  %899 = vmatpush1.msra.mxu0 0.0
  %900 = vmatprep.subr.mxu0 0.0
  %901 = vmatpush1.msra.mxu0 0.0
  %902 = vmatprep.subr.mxu0 0.0
  %903 = vmatpush1.msra.mxu0 0.0
  %904 = vmatprep.subr.mxu0 0.0
  %905 = vmatpush1.msra.mxu0 0.0
  %906 = vmatprep.subr.mxu0 0.0
  %907 = vmatpush1.msra.mxu0 0.0
  %908 = vmatprep.subr.mxu0 0.0
  %909 = vmatpush1.msra.mxu0 0.0
  %910 = vmatprep.subr.mxu0 0.0
  %911 = vmatpush1.msra.mxu0 0.0
  %912 = vmatprep.subr.mxu0 0.0
  %913 = vmatpush1.msra.mxu0 0.0
  %914 = vmatprep.subr.mxu0 0.0
  %915 = vmatpush1.msra.mxu0 0.0
  %916 = vmatprep.subr.mxu0 0.0
  %917 = vmatpush1.msra.mxu0 0.0
  %918 = vmatprep.subr.mxu0 0.0
  %919 = vmatpush1.msra.mxu0 0.0
  %920 = vmatprep.subr.mxu0 0.0
  %921 = vmatpush1.msra.mxu0 %v58
  %922 = vmatprep.subr.mxu0 0.0
  %923 = vmatpush2.msra.mxu0 0.0
  %924 = vmatprep.subr.mxu0 0.0
  %925 = vmatpush2.msra.mxu0 0.0
  %926 = vmatprep.subr.mxu0 0.0
  %927 = vmatpush2.msra.mxu0 0.0
  %928 = vmatprep.subr.mxu0 0.0
  %929 = vmatpush2.msra.mxu0 0.0
  %930 = vmatprep.subr.mxu0 0.0
  %931 = vmatpush2.msra.mxu0 0.0
  %932 = vmatprep.subr.mxu0 0.0
  %933 = vmatpush2.msra.mxu0 0.0
  %934 = vmatprep.subr.mxu0 0.0
  %935 = vmatpush2.msra.mxu0 0.0
  %936 = vmatprep.subr.mxu0 0.0
  %937 = vmatpush2.msra.mxu0 0.0
  %938 = vmatprep.subr.mxu0 0.0
  %939 = vmatpush2.msra.mxu0 0.0
  %940 = vmatprep.subr.mxu0 0.0
  %941 = vmatpush2.msra.mxu0 0.0
  %942 = vmatprep.subr.mxu0 0.0
  %943 = vmatpush2.msra.mxu0 0.0
  %944 = vmatprep.subr.mxu0 0.0
  %945 = vmatpush2.msra.mxu0 0.0
  %946 = vmatprep.subr.mxu0 0.0
  %947 = vmatpush2.msra.mxu0 0.0
  %948 = vmatprep.subr.mxu0 0.0
  %949 = vmatpush2.msra.mxu0 0.0
  %950 = vmatprep.subr.mxu0 0.0
  %951 = vmatpush2.msra.mxu0 0.0
  %952 = vmatprep.subr.mxu0 0.0
  %953 = vmatpush2.msra.mxu0 0.0
  %954 = vmatprep.mubr.f32.mxu0 0.0
  %955 = vmatmul.mubr.f32.gmra.mxu0 %v867
  %v956 = vpop.f32.mrf.mxu0
  %v957 = vadd.f32 0.0, %v956
  %v958 = vpop.f32.mrf.mxu0
  %959 = vmatprep.mubr.f32.mxu0 0.0
  %960 = vmatmul.mubr.f32.gmra.mxu0 %v870
  %v961 = vpop.f32.mrf.mxu0
  %v962 = vadd.f32 0.0, %v961
  %v963 = vpop.f32.mrf.mxu0
  %964 = vmatprep.mubr.f32.mxu0 0.0
  %965 = vmatmul.mubr.f32.gmra.mxu0 %v873
  %v966 = vpop.f32.mrf.mxu0
  %v967 = vadd.f32 0.0, %v966
  %v968 = vpop.f32.mrf.mxu0
  %969 = vmatprep.mubr.f32.mxu0 0.0
  %970 = vmatmul.mubr.f32.gmra.mxu0 %v876
  %v971 = vpop.f32.mrf.mxu0
  %v972 = vadd.f32 0.0, %v971
  %v973 = vpop.f32.mrf.mxu0
  %974 = vmatprep.mubr.f32.mxu0 0.0
  %975 = vmatmul.mubr.f32.gmra.mxu0 %v879
  %v976 = vpop.f32.mrf.mxu0
  %v977 = vadd.f32 0.0, %v976
  %v978 = vpop.f32.mrf.mxu0
  %979 = vmatprep.mubr.f32.mxu0 0.0
  %980 = vmatmul.mubr.f32.gmra.mxu0 %v882
  %v981 = vpop.f32.mrf.mxu0
  %v982 = vadd.f32 0.0, %v981
  %v983 = vpop.f32.mrf.mxu0
  %984 = vmatprep.mubr.f32.mxu0 0.0
  %985 = vmatmul.mubr.f32.gmra.mxu0 %v885
  %v986 = vpop.f32.mrf.mxu0
  %v987 = vadd.f32 0.0, %v986
  %v988 = vpop.f32.mrf.mxu0
  %989 = vmatprep.mubr.f32.mxu0 0.0
  %990 = vmatmul.mubr.f32.gmra.mxu0 %v888
  %v991 = vpop.f32.mrf.mxu0
  %v992 = vadd.f32 0.0, %v991
  %v993 = vpop.f32.mrf.mxu0
  %994 = vdwg.mxu0
  %v996 = vsel %vm317, %v850, 0
  %v999 = vsel %vm317, %v851, 0
  %v1002 = vsel %vm317, %v852, 0
  %v1005 = vsel %vm317, %v853, 0
  %v1008 = vsel %vm317, %v854, 0
  %v1011 = vsel %vm317, %v855, 0
  %v1014 = vsel %vm317, %v856, 0
  %v1017 = vsel %vm317, %v857, 0
  %1019 = vmatprep.subr.mxu0 0.0
  %1020 = vmatpush1.msra.mxu0 0.0
  %1021 = vmatprep.subr.mxu0 0.0
  %1022 = vmatpush1.msra.mxu0 0.0
  %1023 = vmatprep.subr.mxu0 0.0
  %1024 = vmatpush1.msra.mxu0 0.0
  %1025 = vmatprep.subr.mxu0 0.0
  %1026 = vmatpush1.msra.mxu0 0.0
  %1027 = vmatprep.subr.mxu0 0.0
  %1028 = vmatpush1.msra.mxu0 0.0
  %1029 = vmatprep.subr.mxu0 0.0
  %1030 = vmatpush1.msra.mxu0 0.0
  %1031 = vmatprep.subr.mxu0 0.0
  %1032 = vmatpush1.msra.mxu0 0.0
  %1033 = vmatprep.subr.mxu0 0.0
  %1034 = vmatpush1.msra.mxu0 0.0
  %1035 = vmatprep.subr.mxu0 0.0
  %1036 = vmatpush1.msra.mxu0 0.0
  %1037 = vmatprep.subr.mxu0 0.0
  %1038 = vmatpush1.msra.mxu0 0.0
  %1039 = vmatprep.subr.mxu0 0.0
  %1040 = vmatpush1.msra.mxu0 0.0
  %1041 = vmatprep.subr.mxu0 0.0
  %1042 = vmatpush1.msra.mxu0 0.0
  %1043 = vmatprep.subr.mxu0 0.0
  %1044 = vmatpush1.msra.mxu0 0.0
  %1045 = vmatprep.subr.mxu0 0.0
  %1046 = vmatpush1.msra.mxu0 0.0
  %1047 = vmatprep.subr.mxu0 0.0
  %1048 = vmatpush1.msra.mxu0 0.0
  %1049 = vmatprep.subr.mxu0 0.0
  %1050 = vmatpush1.msra.mxu0 %v58
  %1051 = vmatprep.subr.mxu0 0.0
  %1052 = vmatpush2.msra.mxu0 0.0
  %1053 = vmatprep.subr.mxu0 0.0
  %1054 = vmatpush2.msra.mxu0 0.0
  %1055 = vmatprep.subr.mxu0 0.0
  %1056 = vmatpush2.msra.mxu0 0.0
  %1057 = vmatprep.subr.mxu0 0.0
  %1058 = vmatpush2.msra.mxu0 0.0
  %1059 = vmatprep.subr.mxu0 0.0
  %1060 = vmatpush2.msra.mxu0 0.0
  %1061 = vmatprep.subr.mxu0 0.0
  %1062 = vmatpush2.msra.mxu0 0.0
  %1063 = vmatprep.subr.mxu0 0.0
  %1064 = vmatpush2.msra.mxu0 0.0
  %1065 = vmatprep.subr.mxu0 0.0
  %1066 = vmatpush2.msra.mxu0 0.0
  %1067 = vmatprep.subr.mxu0 0.0
  %1068 = vmatpush2.msra.mxu0 0.0
  %1069 = vmatprep.subr.mxu0 0.0
  %1070 = vmatpush2.msra.mxu0 0.0
  %1071 = vmatprep.subr.mxu0 0.0
  %1072 = vmatpush2.msra.mxu0 0.0
  %1073 = vmatprep.subr.mxu0 0.0
  %1074 = vmatpush2.msra.mxu0 0.0
  %1075 = vmatprep.subr.mxu0 0.0
  %1076 = vmatpush2.msra.mxu0 0.0
  %1077 = vmatprep.subr.mxu0 0.0
  %1078 = vmatpush2.msra.mxu0 0.0
  %1079 = vmatprep.subr.mxu0 0.0
  %1080 = vmatpush2.msra.mxu0 0.0
  %1081 = vmatprep.subr.mxu0 0.0
  %1082 = vmatpush2.msra.mxu0 0.0
  %1083 = vmatprep.mubr.f32.mxu0 0.0
  %1084 = vmatmul.mubr.f32.gmra.mxu0 %v996
  %v1085 = vpop.f32.mrf.mxu0
  %v1086 = vadd.f32 %v957, %v1085
  %v1087 = vpop.f32.mrf.mxu0
  %1088 = vmatprep.mubr.f32.mxu0 0.0
  %1089 = vmatmul.mubr.f32.gmra.mxu0 %v999
  %v1090 = vpop.f32.mrf.mxu0
  %v1091 = vadd.f32 %v962, %v1090
  %v1092 = vpop.f32.mrf.mxu0
  %1093 = vmatprep.mubr.f32.mxu0 0.0
  %1094 = vmatmul.mubr.f32.gmra.mxu0 %v1002
  %v1095 = vpop.f32.mrf.mxu0
  %v1096 = vadd.f32 %v967, %v1095
  %v1097 = vpop.f32.mrf.mxu0
  %1098 = vmatprep.mubr.f32.mxu0 0.0
  %1099 = vmatmul.mubr.f32.gmra.mxu0 %v1005
  %v1100 = vpop.f32.mrf.mxu0
  %v1101 = vadd.f32 %v972, %v1100
  %v1102 = vpop.f32.mrf.mxu0
  %1103 = vmatprep.mubr.f32.mxu0 0.0
  %1104 = vmatmul.mubr.f32.gmra.mxu0 %v1008
  %v1105 = vpop.f32.mrf.mxu0
  %v1106 = vadd.f32 %v977, %v1105
  %v1107 = vpop.f32.mrf.mxu0
  %1108 = vmatprep.mubr.f32.mxu0 0.0
  %1109 = vmatmul.mubr.f32.gmra.mxu0 %v1011
  %v1110 = vpop.f32.mrf.mxu0
  %v1111 = vadd.f32 %v982, %v1110
  %v1112 = vpop.f32.mrf.mxu0
  %1113 = vmatprep.mubr.f32.mxu0 0.0
  %1114 = vmatmul.mubr.f32.gmra.mxu0 %v1014
  %v1115 = vpop.f32.mrf.mxu0
  %v1116 = vadd.f32 %v987, %v1115
  %v1117 = vpop.f32.mrf.mxu0
  %1118 = vmatprep.mubr.f32.mxu0 0.0
  %1119 = vmatmul.mubr.f32.gmra.mxu0 %v1017
  %v1120 = vpop.f32.mrf.mxu0
  %v1121 = vadd.f32 %v992, %v1120
  %v1122 = vpop.f32.mrf.mxu0
  %1123 = vdwg.mxu0
  %v1124 = vmul.f32 %v576, %v1086
  %v1125 = vmul.f32 %v577, %v1091
  %v1126 = vmul.f32 %v578, %v1096
  %v1127 = vmul.f32 %v579, %v1101
  %v1128 = vmul.f32 %v580, %v1106
  %v1129 = vmul.f32 %v581, %v1111
  %v1130 = vmul.f32 %v582, %v1116
  %v1131 = vmul.f32 %v583, %v1121
  %v1132 = vld [vmem:[%s2] sm:$0x1]
  %v1134 = vlaneseq
  %v1135 = vshrl.u32 %v1134, 7
  %v1136 = vsub.s32 0, %v1135
  %v1137 = vrot.slane %v1132, %v1136
  %v1139 = vmul.f32 %v1124, %v1137
  %v1140 = vmul.f32 %v1125, %v1137
  %v1141 = vmul.f32 %v1126, %v1137
  %v1142 = vmul.f32 %v1127, %v1137
  %v1143 = vmul.f32 %v1128, %v1137
  %v1144 = vmul.f32 %v1129, %v1137
  %v1145 = vmul.f32 %v1130, %v1137
  %v1146 = vmul.f32 %v1131, %v1137
  %v1147 = vld [vmem:[%s3] sm:$0x1]
  %v1149 = vlaneseq
  %v1150 = vshrl.u32 %v1149, 7
  %v1151 = vsub.s32 0, %v1150
  %v1152 = vrot.slane %v1147, %v1151
  %v1154 = vadd.f32 %v1139, %v1152
  %v1155 = vadd.f32 %v1140, %v1152
  %v1156 = vadd.f32 %v1141, %v1152
  %v1157 = vadd.f32 %v1142, %v1152
  %v1158 = vadd.f32 %v1143, %v1152
  %v1159 = vadd.f32 %v1144, %v1152
  %v1160 = vadd.f32 %v1145, %v1152
  %v1161 = vadd.f32 %v1146, %v1152
  %1162 = vst [vmem:[%s9] sm:$0xff] %v1154
  %1163 = vst [vmem:[%s9 + $0x8] sm:$0xff] %v1155
  %1164 = vst [vmem:[%s9 + $0x10] sm:$0xff] %v1156
  %1165 = vst [vmem:[%s9 + $0x18] sm:$0xff] %v1157
  %1166 = vst [vmem:[%s9 + $0x20] sm:$0xff] %v1158
  %1167 = vst [vmem:[%s9 + $0x28] sm:$0xff] %v1159
  %1168 = vst [vmem:[%s9 + $0x30] sm:$0xff] %v1160
  %1169 = vst [vmem:[%s9 + $0x38] sm:$0xff] %v1161
  %v1170 = vld [vmem:[%s1] sm:$0xff]
  %v1171 = vld [vmem:[%s1 + $0x8] sm:$0xff]
  %v1172 = vld [vmem:[%s1 + $0x10] sm:$0xff]
  %v1173 = vmul.f32 %v1170, %v1170
  %v1174 = vmul.f32 %v1171, %v1171
  %v1175 = vmul.f32 %v1172, %v1172
  %v1176 = vld [vmem:[%s6] sm:$0xff]
  %v1177 = vld [vmem:[%s6 + $0x8] sm:$0xff]
  %v1178 = vld [vmem:[%s6 + $0x10] sm:$0xff]
  %v1179 = vld [vmem:[%s6 + $0x18] sm:$0xff]
  %v1180 = vld [vmem:[%s6 + $0x20] sm:$0xff]
  %v1181 = vld [vmem:[%s6 + $0x28] sm:$0xff]
  %v1182 = vld [vmem:[%s6 + $0x30] sm:$0xff]
  %v1183 = vld [vmem:[%s6 + $0x38] sm:$0xff]
  %v1184 = vld [vmem:[%s6 + $0x40] sm:$0xff]
  %v1185 = vld [vmem:[%s6 + $0x48] sm:$0xff]
  %v1186 = vld [vmem:[%s6 + $0x50] sm:$0xff]
  %v1187 = vld [vmem:[%s6 + $0x58] sm:$0xff]
  %v1188 = vld [vmem:[%s6 + $0x60] sm:$0xff]
  %v1189 = vld [vmem:[%s6 + $0x68] sm:$0xff]
  %v1190 = vld [vmem:[%s6 + $0x70] sm:$0xff]
  %v1191 = vld [vmem:[%s6 + $0x78] sm:$0xff]
  %v1192 = vld [vmem:[%s6 + $0x80] sm:$0xff]
  %v1193 = vld [vmem:[%s6 + $0x88] sm:$0xff]
  %v1194 = vld [vmem:[%s6 + $0x90] sm:$0xff]
  %v1195 = vld [vmem:[%s6 + $0x98] sm:$0xff]
  %v1196 = vld [vmem:[%s6 + $0xa0] sm:$0xff]
  %v1197 = vld [vmem:[%s6 + $0xa8] sm:$0xff]
  %v1198 = vld [vmem:[%s6 + $0xb0] sm:$0xff]
  %v1199 = vld [vmem:[%s6 + $0xb8] sm:$0xff]
  %v1200 = vld [vmem:[%s6 + $0xc0] sm:$0xff]
  %v1201 = vld [vmem:[%s6 + $0xc8] sm:$0xff]
  %v1202 = vld [vmem:[%s6 + $0xd0] sm:$0xff]
  %v1203 = vld [vmem:[%s6 + $0xd8] sm:$0xff]
  %v1204 = vld [vmem:[%s6 + $0xe0] sm:$0xff]
  %v1205 = vld [vmem:[%s6 + $0xe8] sm:$0xff]
  %v1206 = vld [vmem:[%s6 + $0xf0] sm:$0xff]
  %v1207 = vld [vmem:[%s6 + $0xf8] sm:$0xff]
  %v1208 = vld [vmem:[%s6 + $0x100] sm:$0xff]
  %v1209 = vld [vmem:[%s6 + $0x108] sm:$0xff]
  %v1210 = vld [vmem:[%s6 + $0x110] sm:$0xff]
  %v1211 = vld [vmem:[%s6 + $0x118] sm:$0xff]
  %v1212 = vld [vmem:[%s6 + $0x120] sm:$0xff]
  %v1213 = vld [vmem:[%s6 + $0x128] sm:$0xff]
  %v1214 = vld [vmem:[%s6 + $0x130] sm:$0xff]
  %v1215 = vld [vmem:[%s6 + $0x138] sm:$0xff]
  %v1216 = vld [vmem:[%s6 + $0x140] sm:$0xff]
  %v1217 = vld [vmem:[%s6 + $0x148] sm:$0xff]
  %v1218 = vld [vmem:[%s6 + $0x150] sm:$0xff]
  %v1219 = vld [vmem:[%s6 + $0x158] sm:$0xff]
  %v1220 = vld [vmem:[%s6 + $0x160] sm:$0xff]
  %v1221 = vld [vmem:[%s6 + $0x168] sm:$0xff]
  %v1222 = vld [vmem:[%s6 + $0x170] sm:$0xff]
  %v1223 = vld [vmem:[%s6 + $0x178] sm:$0xff]
  %v1224 = vpack.c.bf16 %v1173, %v1173
  %v1225 = vpack.c.bf16 %v1174, %v1174
  %v1226 = vpack.c.bf16 %v1175, %v1175
  %v1227 = vunpack.c.l.bf16 %v1224
  %v1228 = vunpack.c.l.bf16 %v1225
  %v1229 = vunpack.c.l.bf16 %v1226
  %v1230 = vsub.f32 %v1173, %v1227
  %v1231 = vsub.f32 %v1174, %v1228
  %v1232 = vsub.f32 %v1175, %v1229
  %1233 = vmatprep.subr.mxu0 0.0
  %1234 = vmatpush1.msra.mxu0 %v1191
  %1235 = vmatprep.subr.mxu0 0.0
  %1236 = vmatpush1.msra.mxu0 %v1190
  %1237 = vmatprep.subr.mxu0 0.0
  %1238 = vmatpush1.msra.mxu0 %v1189
  %1239 = vmatprep.subr.mxu0 0.0
  %1240 = vmatpush1.msra.mxu0 %v1188
  %1241 = vmatprep.subr.mxu0 0.0
  %1242 = vmatpush1.msra.mxu0 %v1187
  %1243 = vmatprep.subr.mxu0 0.0
  %1244 = vmatpush1.msra.mxu0 %v1186
  %1245 = vmatprep.subr.mxu0 0.0
  %1246 = vmatpush1.msra.mxu0 %v1185
  %1247 = vmatprep.subr.mxu0 0.0
  %1248 = vmatpush1.msra.mxu0 %v1184
  %1249 = vmatprep.subr.mxu0 0.0
  %1250 = vmatpush1.msra.mxu0 %v1183
  %1251 = vmatprep.subr.mxu0 0.0
  %1252 = vmatpush1.msra.mxu0 %v1182
  %1253 = vmatprep.subr.mxu0 0.0
  %1254 = vmatpush1.msra.mxu0 %v1181
  %1255 = vmatprep.subr.mxu0 0.0
  %1256 = vmatpush1.msra.mxu0 %v1180
  %1257 = vmatprep.subr.mxu0 0.0
  %1258 = vmatpush1.msra.mxu0 %v1179
  %1259 = vmatprep.subr.mxu0 0.0
  %1260 = vmatpush1.msra.mxu0 %v1178
  %1261 = vmatprep.subr.mxu0 0.0
  %1262 = vmatpush1.msra.mxu0 %v1177
  %1263 = vmatprep.subr.mxu0 0.0
  %1264 = vmatpush1.msra.mxu0 %v1176
  %1265 = vmatprep.subr.mxu0 0.0
  %1266 = vmatpush2.msra.mxu0 %v1207
  %1267 = vmatprep.subr.mxu0 0.0
  %1268 = vmatpush2.msra.mxu0 %v1206
  %1269 = vmatprep.subr.mxu0 0.0
  %1270 = vmatpush2.msra.mxu0 %v1205
  %1271 = vmatprep.subr.mxu0 0.0
  %1272 = vmatpush2.msra.mxu0 %v1204
  %1273 = vmatprep.subr.mxu0 0.0
  %1274 = vmatpush2.msra.mxu0 %v1203
  %1275 = vmatprep.subr.mxu0 0.0
  %1276 = vmatpush2.msra.mxu0 %v1202
  %1277 = vmatprep.subr.mxu0 0.0
  %1278 = vmatpush2.msra.mxu0 %v1201
  %1279 = vmatprep.subr.mxu0 0.0
  %1280 = vmatpush2.msra.mxu0 %v1200
  %1281 = vmatprep.subr.mxu0 0.0
  %1282 = vmatpush2.msra.mxu0 %v1199
  %1283 = vmatprep.subr.mxu0 0.0
  %1284 = vmatpush2.msra.mxu0 %v1198
  %1285 = vmatprep.subr.mxu0 0.0
  %1286 = vmatpush2.msra.mxu0 %v1197
  %1287 = vmatprep.subr.mxu0 0.0
  %1288 = vmatpush2.msra.mxu0 %v1196
  %1289 = vmatprep.subr.mxu0 0.0
  %1290 = vmatpush2.msra.mxu0 %v1195
  %1291 = vmatprep.subr.mxu0 0.0
  %1292 = vmatpush2.msra.mxu0 %v1194
  %1293 = vmatprep.subr.mxu0 0.0
  %1294 = vmatpush2.msra.mxu0 %v1193
  %1295 = vmatprep.subr.mxu0 0.0
  %1296 = vmatpush2.msra.mxu0 %v1192
  %1297 = vmatprep.mubr.f32.mxu0 %v1231
  %1298 = vmatmul.mubr.f32.gmra.mxu0 %v1230
  %v1299 = vpop.f32.mrf.mxu0
  %v1300 = vadd.f32 0.0, %v1299
  %v1301 = vpop.f32.mrf.mxu0
  %1302 = vdwg.mxu0
  %1303 = vmatprep.subr.mxu0 0.0
  %1304 = vmatpush1.msra.mxu0 %v1223
  %1305 = vmatprep.subr.mxu0 0.0
  %1306 = vmatpush1.msra.mxu0 %v1222
  %1307 = vmatprep.subr.mxu0 0.0
  %1308 = vmatpush1.msra.mxu0 %v1221
  %1309 = vmatprep.subr.mxu0 0.0
  %1310 = vmatpush1.msra.mxu0 %v1220
  %1311 = vmatprep.subr.mxu0 0.0
  %1312 = vmatpush1.msra.mxu0 %v1219
  %1313 = vmatprep.subr.mxu0 0.0
  %1314 = vmatpush1.msra.mxu0 %v1218
  %1315 = vmatprep.subr.mxu0 0.0
  %1316 = vmatpush1.msra.mxu0 %v1217
  %1317 = vmatprep.subr.mxu0 0.0
  %1318 = vmatpush1.msra.mxu0 %v1216
  %1319 = vmatprep.subr.mxu0 0.0
  %1320 = vmatpush1.msra.mxu0 %v1215
  %1321 = vmatprep.subr.mxu0 0.0
  %1322 = vmatpush1.msra.mxu0 %v1214
  %1323 = vmatprep.subr.mxu0 0.0
  %1324 = vmatpush1.msra.mxu0 %v1213
  %1325 = vmatprep.subr.mxu0 0.0
  %1326 = vmatpush1.msra.mxu0 %v1212
  %1327 = vmatprep.subr.mxu0 0.0
  %1328 = vmatpush1.msra.mxu0 %v1211
  %1329 = vmatprep.subr.mxu0 0.0
  %1330 = vmatpush1.msra.mxu0 %v1210
  %1331 = vmatprep.subr.mxu0 0.0
  %1332 = vmatpush1.msra.mxu0 %v1209
  %1333 = vmatprep.subr.mxu0 0.0
  %1334 = vmatpush1.msra.mxu0 %v1208
  %1335 = vmatprep.subr.mxu0 0.0
  %1336 = vmatpush2.msra.mxu0 0.0
  %1337 = vmatprep.subr.mxu0 0.0
  %1338 = vmatpush2.msra.mxu0 0.0
  %1339 = vmatprep.subr.mxu0 0.0
  %1340 = vmatpush2.msra.mxu0 0.0
  %1341 = vmatprep.subr.mxu0 0.0
  %1342 = vmatpush2.msra.mxu0 0.0
  %1343 = vmatprep.subr.mxu0 0.0
  %1344 = vmatpush2.msra.mxu0 0.0
  %1345 = vmatprep.subr.mxu0 0.0
  %1346 = vmatpush2.msra.mxu0 0.0
  %1347 = vmatprep.subr.mxu0 0.0
  %1348 = vmatpush2.msra.mxu0 0.0
  %1349 = vmatprep.subr.mxu0 0.0
  %1350 = vmatpush2.msra.mxu0 0.0
  %1351 = vmatprep.subr.mxu0 0.0
  %1352 = vmatpush2.msra.mxu0 0.0
  %1353 = vmatprep.subr.mxu0 0.0
  %1354 = vmatpush2.msra.mxu0 0.0
  %1355 = vmatprep.subr.mxu0 0.0
  %1356 = vmatpush2.msra.mxu0 0.0
  %1357 = vmatprep.subr.mxu0 0.0
  %1358 = vmatpush2.msra.mxu0 0.0
  %1359 = vmatprep.subr.mxu0 0.0
  %1360 = vmatpush2.msra.mxu0 0.0
  %1361 = vmatprep.subr.mxu0 0.0
  %1362 = vmatpush2.msra.mxu0 0.0
  %1363 = vmatprep.subr.mxu0 0.0
  %1364 = vmatpush2.msra.mxu0 0.0
  %1365 = vmatprep.subr.mxu0 0.0
  %1366 = vmatpush2.msra.mxu0 0.0
  %1367 = vmatprep.mubr.f32.mxu0 0.0
  %1368 = vmatmul.mubr.f32.gmra.mxu0 %v1232
  %v1369 = vpop.f32.mrf.mxu0
  %v1370 = vadd.f32 %v1300, %v1369
  %v1371 = vpop.f32.mrf.mxu0
  %1372 = vdwg.mxu0
  %1373 = vmatprep.subr.mxu0 0.0
  %1374 = vmatpush1.msra.mxu0 %v1191
  %1375 = vmatprep.subr.mxu0 0.0
  %1376 = vmatpush1.msra.mxu0 %v1190
  %1377 = vmatprep.subr.mxu0 0.0
  %1378 = vmatpush1.msra.mxu0 %v1189
  %1379 = vmatprep.subr.mxu0 0.0
  %1380 = vmatpush1.msra.mxu0 %v1188
  %1381 = vmatprep.subr.mxu0 0.0
  %1382 = vmatpush1.msra.mxu0 %v1187
  %1383 = vmatprep.subr.mxu0 0.0
  %1384 = vmatpush1.msra.mxu0 %v1186
  %1385 = vmatprep.subr.mxu0 0.0
  %1386 = vmatpush1.msra.mxu0 %v1185
  %1387 = vmatprep.subr.mxu0 0.0
  %1388 = vmatpush1.msra.mxu0 %v1184
  %1389 = vmatprep.subr.mxu0 0.0
  %1390 = vmatpush1.msra.mxu0 %v1183
  %1391 = vmatprep.subr.mxu0 0.0
  %1392 = vmatpush1.msra.mxu0 %v1182
  %1393 = vmatprep.subr.mxu0 0.0
  %1394 = vmatpush1.msra.mxu0 %v1181
  %1395 = vmatprep.subr.mxu0 0.0
  %1396 = vmatpush1.msra.mxu0 %v1180
  %1397 = vmatprep.subr.mxu0 0.0
  %1398 = vmatpush1.msra.mxu0 %v1179
  %1399 = vmatprep.subr.mxu0 0.0
  %1400 = vmatpush1.msra.mxu0 %v1178
  %1401 = vmatprep.subr.mxu0 0.0
  %1402 = vmatpush1.msra.mxu0 %v1177
  %1403 = vmatprep.subr.mxu0 0.0
  %1404 = vmatpush1.msra.mxu0 %v1176
  %1405 = vmatprep.subr.mxu0 0.0
  %1406 = vmatpush2.msra.mxu0 %v1207
  %1407 = vmatprep.subr.mxu0 0.0
  %1408 = vmatpush2.msra.mxu0 %v1206
  %1409 = vmatprep.subr.mxu0 0.0
  %1410 = vmatpush2.msra.mxu0 %v1205
  %1411 = vmatprep.subr.mxu0 0.0
  %1412 = vmatpush2.msra.mxu0 %v1204
  %1413 = vmatprep.subr.mxu0 0.0
  %1414 = vmatpush2.msra.mxu0 %v1203
  %1415 = vmatprep.subr.mxu0 0.0
  %1416 = vmatpush2.msra.mxu0 %v1202
  %1417 = vmatprep.subr.mxu0 0.0
  %1418 = vmatpush2.msra.mxu0 %v1201
  %1419 = vmatprep.subr.mxu0 0.0
  %1420 = vmatpush2.msra.mxu0 %v1200
  %1421 = vmatprep.subr.mxu0 0.0
  %1422 = vmatpush2.msra.mxu0 %v1199
  %1423 = vmatprep.subr.mxu0 0.0
  %1424 = vmatpush2.msra.mxu0 %v1198
  %1425 = vmatprep.subr.mxu0 0.0
  %1426 = vmatpush2.msra.mxu0 %v1197
  %1427 = vmatprep.subr.mxu0 0.0
  %1428 = vmatpush2.msra.mxu0 %v1196
  %1429 = vmatprep.subr.mxu0 0.0
  %1430 = vmatpush2.msra.mxu0 %v1195
  %1431 = vmatprep.subr.mxu0 0.0
  %1432 = vmatpush2.msra.mxu0 %v1194
  %1433 = vmatprep.subr.mxu0 0.0
  %1434 = vmatpush2.msra.mxu0 %v1193
  %1435 = vmatprep.subr.mxu0 0.0
  %1436 = vmatpush2.msra.mxu0 %v1192
  %1437 = vmatprep.mubr.f32.mxu0 %v1228
  %1438 = vmatmul.mubr.f32.gmra.mxu0 %v1227
  %v1439 = vpop.f32.mrf.mxu0
  %v1440 = vadd.f32 %v1370, %v1439
  %v1441 = vpop.f32.mrf.mxu0
  %1442 = vdwg.mxu0
  %1443 = vmatprep.subr.mxu0 0.0
  %1444 = vmatpush1.msra.mxu0 %v1223
  %1445 = vmatprep.subr.mxu0 0.0
  %1446 = vmatpush1.msra.mxu0 %v1222
  %1447 = vmatprep.subr.mxu0 0.0
  %1448 = vmatpush1.msra.mxu0 %v1221
  %1449 = vmatprep.subr.mxu0 0.0
  %1450 = vmatpush1.msra.mxu0 %v1220
  %1451 = vmatprep.subr.mxu0 0.0
  %1452 = vmatpush1.msra.mxu0 %v1219
  %1453 = vmatprep.subr.mxu0 0.0
  %1454 = vmatpush1.msra.mxu0 %v1218
  %1455 = vmatprep.subr.mxu0 0.0
  %1456 = vmatpush1.msra.mxu0 %v1217
  %1457 = vmatprep.subr.mxu0 0.0
  %1458 = vmatpush1.msra.mxu0 %v1216
  %1459 = vmatprep.subr.mxu0 0.0
  %1460 = vmatpush1.msra.mxu0 %v1215
  %1461 = vmatprep.subr.mxu0 0.0
  %1462 = vmatpush1.msra.mxu0 %v1214
  %1463 = vmatprep.subr.mxu0 0.0
  %1464 = vmatpush1.msra.mxu0 %v1213
  %1465 = vmatprep.subr.mxu0 0.0
  %1466 = vmatpush1.msra.mxu0 %v1212
  %1467 = vmatprep.subr.mxu0 0.0
  %1468 = vmatpush1.msra.mxu0 %v1211
  %1469 = vmatprep.subr.mxu0 0.0
  %1470 = vmatpush1.msra.mxu0 %v1210
  %1471 = vmatprep.subr.mxu0 0.0
  %1472 = vmatpush1.msra.mxu0 %v1209
  %1473 = vmatprep.subr.mxu0 0.0
  %1474 = vmatpush1.msra.mxu0 %v1208
  %1475 = vmatprep.subr.mxu0 0.0
  %1476 = vmatpush2.msra.mxu0 0.0
  %1477 = vmatprep.subr.mxu0 0.0
  %1478 = vmatpush2.msra.mxu0 0.0
  %1479 = vmatprep.subr.mxu0 0.0
  %1480 = vmatpush2.msra.mxu0 0.0
  %1481 = vmatprep.subr.mxu0 0.0
  %1482 = vmatpush2.msra.mxu0 0.0
  %1483 = vmatprep.subr.mxu0 0.0
  %1484 = vmatpush2.msra.mxu0 0.0
  %1485 = vmatprep.subr.mxu0 0.0
  %1486 = vmatpush2.msra.mxu0 0.0
  %1487 = vmatprep.subr.mxu0 0.0
  %1488 = vmatpush2.msra.mxu0 0.0
  %1489 = vmatprep.subr.mxu0 0.0
  %1490 = vmatpush2.msra.mxu0 0.0
  %1491 = vmatprep.subr.mxu0 0.0
  %1492 = vmatpush2.msra.mxu0 0.0
  %1493 = vmatprep.subr.mxu0 0.0
  %1494 = vmatpush2.msra.mxu0 0.0
  %1495 = vmatprep.subr.mxu0 0.0
  %1496 = vmatpush2.msra.mxu0 0.0
  %1497 = vmatprep.subr.mxu0 0.0
  %1498 = vmatpush2.msra.mxu0 0.0
  %1499 = vmatprep.subr.mxu0 0.0
  %1500 = vmatpush2.msra.mxu0 0.0
  %1501 = vmatprep.subr.mxu0 0.0
  %1502 = vmatpush2.msra.mxu0 0.0
  %1503 = vmatprep.subr.mxu0 0.0
  %1504 = vmatpush2.msra.mxu0 0.0
  %1505 = vmatprep.subr.mxu0 0.0
  %1506 = vmatpush2.msra.mxu0 0.0
  %1507 = vmatprep.mubr.f32.mxu0 0.0
  %1508 = vmatmul.mubr.f32.gmra.mxu0 %v1229
  %v1509 = vpop.f32.mrf.mxu0
  %v1510 = vadd.f32 %v1440, %v1509
  %v1511 = vpop.f32.mrf.mxu0
  %1512 = vdwg.mxu0
  %v1513 = vmax.f32 %v1510, 1e-08
  %v1514 = vld [vmem:[%s7] sm:$0xff]
  %v1515 = vld [vmem:[%s7 + $0x8] sm:$0xff]
  %v1516 = vld [vmem:[%s7 + $0x10] sm:$0xff]
  %v1517 = vld [vmem:[%s7 + $0x18] sm:$0xff]
  %v1518 = vld [vmem:[%s7 + $0x20] sm:$0xff]
  %v1519 = vld [vmem:[%s7 + $0x28] sm:$0xff]
  %v1520 = vld [vmem:[%s7 + $0x30] sm:$0xff]
  %v1521 = vld [vmem:[%s7 + $0x38] sm:$0xff]
  %v1522 = vld [vmem:[%s7 + $0x40] sm:$0xff]
  %v1523 = vld [vmem:[%s7 + $0x48] sm:$0xff]
  %v1524 = vld [vmem:[%s7 + $0x50] sm:$0xff]
  %v1525 = vld [vmem:[%s7 + $0x58] sm:$0xff]
  %v1526 = vld [vmem:[%s7 + $0x60] sm:$0xff]
  %v1527 = vld [vmem:[%s7 + $0x68] sm:$0xff]
  %v1528 = vld [vmem:[%s7 + $0x70] sm:$0xff]
  %v1529 = vld [vmem:[%s7 + $0x78] sm:$0xff]
  %v1530 = vpack.c.bf16 %v1513, %v1513
  %v1531 = vunpack.c.l.bf16 %v1530
  %v1532 = vsub.f32 %v1513, %v1531
  %1533 = vmatprep.subr.mxu0 0.0
  %1534 = vmatpush1.msra.mxu0 %v1529
  %1535 = vmatprep.subr.mxu0 0.0
  %1536 = vmatpush1.msra.mxu0 %v1528
  %1537 = vmatprep.subr.mxu0 0.0
  %1538 = vmatpush1.msra.mxu0 %v1527
  %1539 = vmatprep.subr.mxu0 0.0
  %1540 = vmatpush1.msra.mxu0 %v1526
  %1541 = vmatprep.subr.mxu0 0.0
  %1542 = vmatpush1.msra.mxu0 %v1525
  %1543 = vmatprep.subr.mxu0 0.0
  %1544 = vmatpush1.msra.mxu0 %v1524
  %1545 = vmatprep.subr.mxu0 0.0
  %1546 = vmatpush1.msra.mxu0 %v1523
  %1547 = vmatprep.subr.mxu0 0.0
  %1548 = vmatpush1.msra.mxu0 %v1522
  %1549 = vmatprep.subr.mxu0 0.0
  %1550 = vmatpush1.msra.mxu0 %v1521
  %1551 = vmatprep.subr.mxu0 0.0
  %1552 = vmatpush1.msra.mxu0 %v1520
  %1553 = vmatprep.subr.mxu0 0.0
  %1554 = vmatpush1.msra.mxu0 %v1519
  %1555 = vmatprep.subr.mxu0 0.0
  %1556 = vmatpush1.msra.mxu0 %v1518
  %1557 = vmatprep.subr.mxu0 0.0
  %1558 = vmatpush1.msra.mxu0 %v1517
  %1559 = vmatprep.subr.mxu0 0.0
  %1560 = vmatpush1.msra.mxu0 %v1516
  %1561 = vmatprep.subr.mxu0 0.0
  %1562 = vmatpush1.msra.mxu0 %v1515
  %1563 = vmatprep.subr.mxu0 0.0
  %1564 = vmatpush1.msra.mxu0 %v1514
  %1565 = vmatprep.subr.mxu0 0.0
  %1566 = vmatpush2.msra.mxu0 0.0
  %1567 = vmatprep.subr.mxu0 0.0
  %1568 = vmatpush2.msra.mxu0 0.0
  %1569 = vmatprep.subr.mxu0 0.0
  %1570 = vmatpush2.msra.mxu0 0.0
  %1571 = vmatprep.subr.mxu0 0.0
  %1572 = vmatpush2.msra.mxu0 0.0
  %1573 = vmatprep.subr.mxu0 0.0
  %1574 = vmatpush2.msra.mxu0 0.0
  %1575 = vmatprep.subr.mxu0 0.0
  %1576 = vmatpush2.msra.mxu0 0.0
  %1577 = vmatprep.subr.mxu0 0.0
  %1578 = vmatpush2.msra.mxu0 0.0
  %1579 = vmatprep.subr.mxu0 0.0
  %1580 = vmatpush2.msra.mxu0 0.0
  %1581 = vmatprep.subr.mxu0 0.0
  %1582 = vmatpush2.msra.mxu0 0.0
  %1583 = vmatprep.subr.mxu0 0.0
  %1584 = vmatpush2.msra.mxu0 0.0
  %1585 = vmatprep.subr.mxu0 0.0
  %1586 = vmatpush2.msra.mxu0 0.0
  %1587 = vmatprep.subr.mxu0 0.0
  %1588 = vmatpush2.msra.mxu0 0.0
  %1589 = vmatprep.subr.mxu0 0.0
  %1590 = vmatpush2.msra.mxu0 0.0
  %1591 = vmatprep.subr.mxu0 0.0
  %1592 = vmatpush2.msra.mxu0 0.0
  %1593 = vmatprep.subr.mxu0 0.0
  %1594 = vmatpush2.msra.mxu0 0.0
  %1595 = vmatprep.subr.mxu0 0.0
  %1596 = vmatpush2.msra.mxu0 0.0
  %1597 = vmatprep.mubr.f32.mxu0 0.0
  %1598 = vmatmul.mubr.f32.gmra.mxu0 %v1532
  %v1599 = vpop.f32.mrf.mxu0
  %v1600 = vadd.f32 0.0, %v1599
  %v1601 = vpop.f32.mrf.mxu0
  %1602 = vdwg.mxu0
  %1603 = vmatprep.subr.mxu0 0.0
  %1604 = vmatpush1.msra.mxu0 %v1529
  %1605 = vmatprep.subr.mxu0 0.0
  %1606 = vmatpush1.msra.mxu0 %v1528
  %1607 = vmatprep.subr.mxu0 0.0
  %1608 = vmatpush1.msra.mxu0 %v1527
  %1609 = vmatprep.subr.mxu0 0.0
  %1610 = vmatpush1.msra.mxu0 %v1526
  %1611 = vmatprep.subr.mxu0 0.0
  %1612 = vmatpush1.msra.mxu0 %v1525
  %1613 = vmatprep.subr.mxu0 0.0
  %1614 = vmatpush1.msra.mxu0 %v1524
  %1615 = vmatprep.subr.mxu0 0.0
  %1616 = vmatpush1.msra.mxu0 %v1523
  %1617 = vmatprep.subr.mxu0 0.0
  %1618 = vmatpush1.msra.mxu0 %v1522
  %1619 = vmatprep.subr.mxu0 0.0
  %1620 = vmatpush1.msra.mxu0 %v1521
  %1621 = vmatprep.subr.mxu0 0.0
  %1622 = vmatpush1.msra.mxu0 %v1520
  %1623 = vmatprep.subr.mxu0 0.0
  %1624 = vmatpush1.msra.mxu0 %v1519
  %1625 = vmatprep.subr.mxu0 0.0
  %1626 = vmatpush1.msra.mxu0 %v1518
  %1627 = vmatprep.subr.mxu0 0.0
  %1628 = vmatpush1.msra.mxu0 %v1517
  %1629 = vmatprep.subr.mxu0 0.0
  %1630 = vmatpush1.msra.mxu0 %v1516
  %1631 = vmatprep.subr.mxu0 0.0
  %1632 = vmatpush1.msra.mxu0 %v1515
  %1633 = vmatprep.subr.mxu0 0.0
  %1634 = vmatpush1.msra.mxu0 %v1514
  %1635 = vmatprep.subr.mxu0 0.0
  %1636 = vmatpush2.msra.mxu0 0.0
  %1637 = vmatprep.subr.mxu0 0.0
  %1638 = vmatpush2.msra.mxu0 0.0
  %1639 = vmatprep.subr.mxu0 0.0
  %1640 = vmatpush2.msra.mxu0 0.0
  %1641 = vmatprep.subr.mxu0 0.0
  %1642 = vmatpush2.msra.mxu0 0.0
  %1643 = vmatprep.subr.mxu0 0.0
  %1644 = vmatpush2.msra.mxu0 0.0
  %1645 = vmatprep.subr.mxu0 0.0
  %1646 = vmatpush2.msra.mxu0 0.0
  %1647 = vmatprep.subr.mxu0 0.0
  %1648 = vmatpush2.msra.mxu0 0.0
  %1649 = vmatprep.subr.mxu0 0.0
  %1650 = vmatpush2.msra.mxu0 0.0
  %1651 = vmatprep.subr.mxu0 0.0
  %1652 = vmatpush2.msra.mxu0 0.0
  %1653 = vmatprep.subr.mxu0 0.0
  %1654 = vmatpush2.msra.mxu0 0.0
  %1655 = vmatprep.subr.mxu0 0.0
  %1656 = vmatpush2.msra.mxu0 0.0
  %1657 = vmatprep.subr.mxu0 0.0
  %1658 = vmatpush2.msra.mxu0 0.0
  %1659 = vmatprep.subr.mxu0 0.0
  %1660 = vmatpush2.msra.mxu0 0.0
  %1661 = vmatprep.subr.mxu0 0.0
  %1662 = vmatpush2.msra.mxu0 0.0
  %1663 = vmatprep.subr.mxu0 0.0
  %1664 = vmatpush2.msra.mxu0 0.0
  %1665 = vmatprep.subr.mxu0 0.0
  %1666 = vmatpush2.msra.mxu0 0.0
  %1667 = vmatprep.mubr.f32.mxu0 0.0
  %1668 = vmatmul.mubr.f32.gmra.mxu0 %v1531
  %v1669 = vpop.f32.mrf.mxu0
  %v1670 = vadd.f32 %v1600, %v1669
  %v1671 = vpop.f32.mrf.mxu0
  %1672 = vdwg.mxu0
  %v1673 = vmul.f32 %v1670, 0.25
  %v1674 = vadd.f32 %v1673, 1e-05
  %v1675 = vrsqrt.pop %v1674
  %v1676 = vmul.f32 %v1674, %v1675
  %vm1677 = vcmp.eq.f32.partialorder %v1674, inf
  %v1678 = vsel %vm1677, %v1674, %v1676
  %vm1679 = vcmp.eq.f32.partialorder %v1674, 0.0
  %v1680 = vand.u32 %v1674, 2147483648
  %v1681 = vsel %vm1679, %v1680, %v1678
  %v1682 = vadd.f32 %v1681, 1e-05
  %v1683 = vrcp.pop %v1682
  %v1684 = vmul.f32 1.0, %v1683
  %v1685 = vld [vmem:[%s8] sm:$0xff]
  %v1686 = vld [vmem:[%s8 + $0x8] sm:$0xff]
  %v1687 = vld [vmem:[%s8 + $0x10] sm:$0xff]
  %v1688 = vld [vmem:[%s8 + $0x18] sm:$0xff]
  %v1689 = vld [vmem:[%s8 + $0x20] sm:$0xff]
  %v1690 = vld [vmem:[%s8 + $0x28] sm:$0xff]
  %v1691 = vld [vmem:[%s8 + $0x30] sm:$0xff]
  %v1692 = vld [vmem:[%s8 + $0x38] sm:$0xff]
  %v1693 = vld [vmem:[%s8 + $0x40] sm:$0xff]
  %v1694 = vld [vmem:[%s8 + $0x48] sm:$0xff]
  %v1695 = vld [vmem:[%s8 + $0x50] sm:$0xff]
  %v1696 = vld [vmem:[%s8 + $0x58] sm:$0xff]
  %v1697 = vpack.c.bf16 %v1684, %v1684
  %v1698 = vunpack.c.l.bf16 %v1697
  %v1699 = vsub.f32 %v1684, %v1698
  %vm1700 = vcmask 261120
  %v1702 = vsel %vm1700, %v1699, 0
  %1704 = vmatprep.subr.mxu0 0.0
  %1705 = vmatpush1.msra.mxu0 0.0
  %1706 = vmatprep.subr.mxu0 0.0
  %1707 = vmatpush1.msra.mxu0 0.0
  %1708 = vmatprep.subr.mxu0 0.0
  %1709 = vmatpush1.msra.mxu0 0.0
  %1710 = vmatprep.subr.mxu0 0.0
  %1711 = vmatpush1.msra.mxu0 0.0
  %1712 = vmatprep.subr.mxu0 0.0
  %1713 = vmatpush1.msra.mxu0 0.0
  %1714 = vmatprep.subr.mxu0 0.0
  %1715 = vmatpush1.msra.mxu0 0.0
  %1716 = vmatprep.subr.mxu0 0.0
  %1717 = vmatpush1.msra.mxu0 0.0
  %1718 = vmatprep.subr.mxu0 0.0
  %1719 = vmatpush1.msra.mxu0 0.0
  %1720 = vmatprep.subr.mxu0 0.0
  %1721 = vmatpush1.msra.mxu0 0.0
  %1722 = vmatprep.subr.mxu0 0.0
  %1723 = vmatpush1.msra.mxu0 0.0
  %1724 = vmatprep.subr.mxu0 0.0
  %1725 = vmatpush1.msra.mxu0 0.0
  %1726 = vmatprep.subr.mxu0 0.0
  %1727 = vmatpush1.msra.mxu0 0.0
  %1728 = vmatprep.subr.mxu0 %v1695
  %1729 = vmatpush1.msra.mxu0 %v1694
  %1730 = vmatprep.subr.mxu0 %v1692
  %1731 = vmatpush1.msra.mxu0 %v1691
  %1732 = vmatprep.subr.mxu0 %v1689
  %1733 = vmatpush1.msra.mxu0 %v1688
  %1734 = vmatprep.subr.mxu0 %v1686
  %1735 = vmatpush1.msra.mxu0 %v1685
  %1736 = vmatprep.subr.mxu0 0.0
  %1737 = vmatpush2.msra.mxu0 0.0
  %1738 = vmatprep.subr.mxu0 0.0
  %1739 = vmatpush2.msra.mxu0 0.0
  %1740 = vmatprep.subr.mxu0 0.0
  %1741 = vmatpush2.msra.mxu0 0.0
  %1742 = vmatprep.subr.mxu0 0.0
  %1743 = vmatpush2.msra.mxu0 0.0
  %1744 = vmatprep.subr.mxu0 0.0
  %1745 = vmatpush2.msra.mxu0 0.0
  %1746 = vmatprep.subr.mxu0 0.0
  %1747 = vmatpush2.msra.mxu0 0.0
  %1748 = vmatprep.subr.mxu0 0.0
  %1749 = vmatpush2.msra.mxu0 0.0
  %1750 = vmatprep.subr.mxu0 0.0
  %1751 = vmatpush2.msra.mxu0 0.0
  %1752 = vmatprep.subr.mxu0 0.0
  %1753 = vmatpush2.msra.mxu0 0.0
  %1754 = vmatprep.subr.mxu0 0.0
  %1755 = vmatpush2.msra.mxu0 0.0
  %1756 = vmatprep.subr.mxu0 0.0
  %1757 = vmatpush2.msra.mxu0 0.0
  %1758 = vmatprep.subr.mxu0 0.0
  %1759 = vmatpush2.msra.mxu0 0.0
  %1760 = vmatprep.subr.mxu0 0.0
  %1761 = vmatpush2.msra.mxu0 0.0
  %1762 = vmatprep.subr.mxu0 0.0
  %1763 = vmatpush2.msra.mxu0 0.0
  %1764 = vmatprep.subr.mxu0 0.0
  %1765 = vmatpush2.msra.mxu0 0.0
  %1766 = vmatprep.subr.mxu0 0.0
  %1767 = vmatpush2.msra.mxu0 0.0
  %1768 = vmatprep.mubr.f32.mxu0 0.0
  %1769 = vmatmul.mubr.f32.gmra.mxu0 %v1702
  %v1770 = vpop.f32.mrf.mxu0
  %v1771 = vadd.f32 0.0, %v1770
  %v1772 = vpop.f32.mrf.mxu0
  %v1773 = vadd.f32 0.0, %v1772
  %1774 = vdwg.mxu0
  %1775 = vmatprep.subr.mxu0 0.0
  %1776 = vmatpush1.msra.mxu0 0.0
  %1777 = vmatprep.subr.mxu0 0.0
  %1778 = vmatpush1.msra.mxu0 0.0
  %1779 = vmatprep.subr.mxu0 0.0
  %1780 = vmatpush1.msra.mxu0 0.0
  %1781 = vmatprep.subr.mxu0 0.0
  %1782 = vmatpush1.msra.mxu0 0.0
  %1783 = vmatprep.subr.mxu0 0.0
  %1784 = vmatpush1.msra.mxu0 0.0
  %1785 = vmatprep.subr.mxu0 0.0
  %1786 = vmatpush1.msra.mxu0 0.0
  %1787 = vmatprep.subr.mxu0 0.0
  %1788 = vmatpush1.msra.mxu0 0.0
  %1789 = vmatprep.subr.mxu0 0.0
  %1790 = vmatpush1.msra.mxu0 0.0
  %1791 = vmatprep.subr.mxu0 0.0
  %1792 = vmatpush1.msra.mxu0 0.0
  %1793 = vmatprep.subr.mxu0 0.0
  %1794 = vmatpush1.msra.mxu0 0.0
  %1795 = vmatprep.subr.mxu0 0.0
  %1796 = vmatpush1.msra.mxu0 0.0
  %1797 = vmatprep.subr.mxu0 0.0
  %1798 = vmatpush1.msra.mxu0 0.0
  %1799 = vmatprep.subr.mxu0 0.0
  %1800 = vmatpush1.msra.mxu0 %v1696
  %1801 = vmatprep.subr.mxu0 0.0
  %1802 = vmatpush1.msra.mxu0 %v1693
  %1803 = vmatprep.subr.mxu0 0.0
  %1804 = vmatpush1.msra.mxu0 %v1690
  %1805 = vmatprep.subr.mxu0 0.0
  %1806 = vmatpush1.msra.mxu0 %v1687
  %1807 = vmatprep.subr.mxu0 0.0
  %1808 = vmatpush2.msra.mxu0 0.0
  %1809 = vmatprep.subr.mxu0 0.0
  %1810 = vmatpush2.msra.mxu0 0.0
  %1811 = vmatprep.subr.mxu0 0.0
  %1812 = vmatpush2.msra.mxu0 0.0
  %1813 = vmatprep.subr.mxu0 0.0
  %1814 = vmatpush2.msra.mxu0 0.0
  %1815 = vmatprep.subr.mxu0 0.0
  %1816 = vmatpush2.msra.mxu0 0.0
  %1817 = vmatprep.subr.mxu0 0.0
  %1818 = vmatpush2.msra.mxu0 0.0
  %1819 = vmatprep.subr.mxu0 0.0
  %1820 = vmatpush2.msra.mxu0 0.0
  %1821 = vmatprep.subr.mxu0 0.0
  %1822 = vmatpush2.msra.mxu0 0.0
  %1823 = vmatprep.subr.mxu0 0.0
  %1824 = vmatpush2.msra.mxu0 0.0
  %1825 = vmatprep.subr.mxu0 0.0
  %1826 = vmatpush2.msra.mxu0 0.0
  %1827 = vmatprep.subr.mxu0 0.0
  %1828 = vmatpush2.msra.mxu0 0.0
  %1829 = vmatprep.subr.mxu0 0.0
  %1830 = vmatpush2.msra.mxu0 0.0
  %1831 = vmatprep.subr.mxu0 0.0
  %1832 = vmatpush2.msra.mxu0 0.0
  %1833 = vmatprep.subr.mxu0 0.0
  %1834 = vmatpush2.msra.mxu0 0.0
  %1835 = vmatprep.subr.mxu0 0.0
  %1836 = vmatpush2.msra.mxu0 0.0
  %1837 = vmatprep.subr.mxu0 0.0
  %1838 = vmatpush2.msra.mxu0 0.0
  %1839 = vmatprep.mubr.f32.mxu0 0.0
  %1840 = vmatmul.mubr.f32.gmra.mxu0 %v1702
  %v1841 = vpop.f32.mrf.mxu0
  %v1842 = vadd.f32 0.0, %v1841
  %v1843 = vpop.f32.mrf.mxu0
  %1844 = vdwg.mxu0
  %v1846 = vsel %vm1700, %v1698, 0
  %1848 = vmatprep.subr.mxu0 0.0
  %1849 = vmatpush1.msra.mxu0 0.0
  %1850 = vmatprep.subr.mxu0 0.0
  %1851 = vmatpush1.msra.mxu0 0.0
  %1852 = vmatprep.subr.mxu0 0.0
  %1853 = vmatpush1.msra.mxu0 0.0
  %1854 = vmatprep.subr.mxu0 0.0
  %1855 = vmatpush1.msra.mxu0 0.0
  %1856 = vmatprep.subr.mxu0 0.0
  %1857 = vmatpush1.msra.mxu0 0.0
  %1858 = vmatprep.subr.mxu0 0.0
  %1859 = vmatpush1.msra.mxu0 0.0
  %1860 = vmatprep.subr.mxu0 0.0
  %1861 = vmatpush1.msra.mxu0 0.0
  %1862 = vmatprep.subr.mxu0 0.0
  %1863 = vmatpush1.msra.mxu0 0.0
  %1864 = vmatprep.subr.mxu0 0.0
  %1865 = vmatpush1.msra.mxu0 0.0
  %1866 = vmatprep.subr.mxu0 0.0
  %1867 = vmatpush1.msra.mxu0 0.0
  %1868 = vmatprep.subr.mxu0 0.0
  %1869 = vmatpush1.msra.mxu0 0.0
  %1870 = vmatprep.subr.mxu0 0.0
  %1871 = vmatpush1.msra.mxu0 0.0
  %1872 = vmatprep.subr.mxu0 %v1695
  %1873 = vmatpush1.msra.mxu0 %v1694
  %1874 = vmatprep.subr.mxu0 %v1692
  %1875 = vmatpush1.msra.mxu0 %v1691
  %1876 = vmatprep.subr.mxu0 %v1689
  %1877 = vmatpush1.msra.mxu0 %v1688
  %1878 = vmatprep.subr.mxu0 %v1686
  %1879 = vmatpush1.msra.mxu0 %v1685
  %1880 = vmatprep.subr.mxu0 0.0
  %1881 = vmatpush2.msra.mxu0 0.0
  %1882 = vmatprep.subr.mxu0 0.0
  %1883 = vmatpush2.msra.mxu0 0.0
  %1884 = vmatprep.subr.mxu0 0.0
  %1885 = vmatpush2.msra.mxu0 0.0
  %1886 = vmatprep.subr.mxu0 0.0
  %1887 = vmatpush2.msra.mxu0 0.0
  %1888 = vmatprep.subr.mxu0 0.0
  %1889 = vmatpush2.msra.mxu0 0.0
  %1890 = vmatprep.subr.mxu0 0.0
  %1891 = vmatpush2.msra.mxu0 0.0
  %1892 = vmatprep.subr.mxu0 0.0
  %1893 = vmatpush2.msra.mxu0 0.0
  %1894 = vmatprep.subr.mxu0 0.0
  %1895 = vmatpush2.msra.mxu0 0.0
  %1896 = vmatprep.subr.mxu0 0.0
  %1897 = vmatpush2.msra.mxu0 0.0
  %1898 = vmatprep.subr.mxu0 0.0
  %1899 = vmatpush2.msra.mxu0 0.0
  %1900 = vmatprep.subr.mxu0 0.0
  %1901 = vmatpush2.msra.mxu0 0.0
  %1902 = vmatprep.subr.mxu0 0.0
  %1903 = vmatpush2.msra.mxu0 0.0
  %1904 = vmatprep.subr.mxu0 0.0
  %1905 = vmatpush2.msra.mxu0 0.0
  %1906 = vmatprep.subr.mxu0 0.0
  %1907 = vmatpush2.msra.mxu0 0.0
  %1908 = vmatprep.subr.mxu0 0.0
  %1909 = vmatpush2.msra.mxu0 0.0
  %1910 = vmatprep.subr.mxu0 0.0
  %1911 = vmatpush2.msra.mxu0 0.0
  %1912 = vmatprep.mubr.f32.mxu0 0.0
  %1913 = vmatmul.mubr.f32.gmra.mxu0 %v1846
  %v1914 = vpop.f32.mrf.mxu0
  %v1915 = vadd.f32 %v1771, %v1914
  %v1916 = vpop.f32.mrf.mxu0
  %v1917 = vadd.f32 %v1773, %v1916
  %1918 = vdwg.mxu0
  %1919 = vmatprep.subr.mxu0 0.0
  %1920 = vmatpush1.msra.mxu0 0.0
  %1921 = vmatprep.subr.mxu0 0.0
  %1922 = vmatpush1.msra.mxu0 0.0
  %1923 = vmatprep.subr.mxu0 0.0
  %1924 = vmatpush1.msra.mxu0 0.0
  %1925 = vmatprep.subr.mxu0 0.0
  %1926 = vmatpush1.msra.mxu0 0.0
  %1927 = vmatprep.subr.mxu0 0.0
  %1928 = vmatpush1.msra.mxu0 0.0
  %1929 = vmatprep.subr.mxu0 0.0
  %1930 = vmatpush1.msra.mxu0 0.0
  %1931 = vmatprep.subr.mxu0 0.0
  %1932 = vmatpush1.msra.mxu0 0.0
  %1933 = vmatprep.subr.mxu0 0.0
  %1934 = vmatpush1.msra.mxu0 0.0
  %1935 = vmatprep.subr.mxu0 0.0
  %1936 = vmatpush1.msra.mxu0 0.0
  %1937 = vmatprep.subr.mxu0 0.0
  %1938 = vmatpush1.msra.mxu0 0.0
  %1939 = vmatprep.subr.mxu0 0.0
  %1940 = vmatpush1.msra.mxu0 0.0
  %1941 = vmatprep.subr.mxu0 0.0
  %1942 = vmatpush1.msra.mxu0 0.0
  %1943 = vmatprep.subr.mxu0 0.0
  %1944 = vmatpush1.msra.mxu0 %v1696
  %1945 = vmatprep.subr.mxu0 0.0
  %1946 = vmatpush1.msra.mxu0 %v1693
  %1947 = vmatprep.subr.mxu0 0.0
  %1948 = vmatpush1.msra.mxu0 %v1690
  %1949 = vmatprep.subr.mxu0 0.0
  %1950 = vmatpush1.msra.mxu0 %v1687
  %1951 = vmatprep.subr.mxu0 0.0
  %1952 = vmatpush2.msra.mxu0 0.0
  %1953 = vmatprep.subr.mxu0 0.0
  %1954 = vmatpush2.msra.mxu0 0.0
  %1955 = vmatprep.subr.mxu0 0.0
  %1956 = vmatpush2.msra.mxu0 0.0
  %1957 = vmatprep.subr.mxu0 0.0
  %1958 = vmatpush2.msra.mxu0 0.0
  %1959 = vmatprep.subr.mxu0 0.0
  %1960 = vmatpush2.msra.mxu0 0.0
  %1961 = vmatprep.subr.mxu0 0.0
  %1962 = vmatpush2.msra.mxu0 0.0
  %1963 = vmatprep.subr.mxu0 0.0
  %1964 = vmatpush2.msra.mxu0 0.0
  %1965 = vmatprep.subr.mxu0 0.0
  %1966 = vmatpush2.msra.mxu0 0.0
  %1967 = vmatprep.subr.mxu0 0.0
  %1968 = vmatpush2.msra.mxu0 0.0
  %1969 = vmatprep.subr.mxu0 0.0
  %1970 = vmatpush2.msra.mxu0 0.0
  %1971 = vmatprep.subr.mxu0 0.0
  %1972 = vmatpush2.msra.mxu0 0.0
  %1973 = vmatprep.subr.mxu0 0.0
  %1974 = vmatpush2.msra.mxu0 0.0
  %1975 = vmatprep.subr.mxu0 0.0
  %1976 = vmatpush2.msra.mxu0 0.0
  %1977 = vmatprep.subr.mxu0 0.0
  %1978 = vmatpush2.msra.mxu0 0.0
  %1979 = vmatprep.subr.mxu0 0.0
  %1980 = vmatpush2.msra.mxu0 0.0
  %1981 = vmatprep.subr.mxu0 0.0
  %1982 = vmatpush2.msra.mxu0 0.0
  %1983 = vmatprep.mubr.f32.mxu0 0.0
  %1984 = vmatmul.mubr.f32.gmra.mxu0 %v1846
  %v1985 = vpop.f32.mrf.mxu0
  %v1986 = vadd.f32 %v1842, %v1985
  %v1987 = vpop.f32.mrf.mxu0
  %1988 = vdwg.mxu0
  %v1989 = vmul.f32 %v1170, %v1915
  %v1990 = vmul.f32 %v1171, %v1917
  %v1991 = vmul.f32 %v1172, %v1986
  %1992 = vst [vmem:[%s10] sm:$0xff] %v1989
  %1993 = vst [vmem:[%s10 + $0x8] sm:$0xff] %v1990
  %1994 = vst [vmem:[%s10 + $0x10] sm:$0xff] %v1991
  // Predicated region
  $region38: #{gvp_layernorm.1} parent=0 // pred_check
    _
  $region39: #{gvp_layernorm.1} parent=0 // pred_check_branch
    %1996 = sbr.rel (0) target = $region41
  $region40: #{gvp_layernorm.1} parent=0 // pred_region
    _
  $region41: #{gvp_layernorm.1} parent=0 // pred_fallthru
    _
  // Predicated region
  $region42: #{gvp_layernorm.1} parent=0 // pred_check
    _
  $region43: #{gvp_layernorm.1} parent=0 // pred_check_branch
    %1998 = sbr.rel (0) target = $region45
  $region44: #{gvp_layernorm.1} parent=0 // pred_region
    _
  $region45: #{gvp_layernorm.1} parent=0 // pred_fallthru
    _
  // Predicated region
  $region46: #{gvp_layernorm.1} parent=0 // pred_check
    _
  $region47: #{gvp_layernorm.1} parent=0 // pred_check_branch
    %2000 = sbr.rel (0) target = $region49
  $region48: #{gvp_layernorm.1} parent=0 // pred_region
    _
  $region49: #{gvp_layernorm.1} parent=0 // pred_fallthru
    _
  // Predicated region
  $region50: #{gvp_layernorm.1} parent=0 // pred_check
    _
  $region51: #{gvp_layernorm.1} parent=0 // pred_check_branch
    %2002 = sbr.rel (0) target = $region53
  $region52: #{gvp_layernorm.1} parent=0 // pred_region
    _
  $region53: #{gvp_layernorm.1} parent=0 // pred_fallthru
    _

</llo_original>
